<compile_context>
chip_gen: v7x
topology: tpu7x:2x2x1
jax: 0.10.0
libtpu: 0.0.40
codegen_flags: <defaults>
</compile_context>

<pallas_src>
import math
from functools import partial

import jax
import jax.numpy as jnp
from jax import lax
from jax.experimental import pallas as pl
from jax.experimental.pallas import tpu as pltpu


_VMEM_LIMIT = 64 * 1024 * 1024  # explicit cap; tiles below are sized well under it


def _pick_tile(n, candidates=(512, 256, 128)):
    """Largest MXU/lane-friendly tile that divides n, else the full extent."""
    for t in candidates:
        if n % t == 0:
            return t
    return n


# ----------------------- stage 1: fused Q/K/V projection ---------------------

def _qkv_proj_kernel(xq_ref, xk_ref, xv_ref,
                     wq_ref, bq_ref, wk_ref, bk_ref, wv_ref, bv_ref,
                     q_ref, k_ref, v_ref, *, q_scale):
    f32 = jnp.float32
    q = jnp.dot(xq_ref[...], wq_ref[...], preferred_element_type=f32)
    q = (q + bq_ref[...].astype(f32)) * q_scale          # fold 1/sqrt(d_k) into Q
    k = jnp.dot(xk_ref[...], wk_ref[...], preferred_element_type=f32)
    k = k + bk_ref[...].astype(f32)
    v = jnp.dot(xv_ref[...], wv_ref[...], preferred_element_type=f32)
    v = v + bv_ref[...].astype(f32)
    q_ref[...] = q.astype(q_ref.dtype)
    k_ref[...] = k.astype(k_ref.dtype)
    v_ref[...] = v.astype(v_ref.dtype)


def _qkv_projection(xq, xk, xv, wq, bq, wk, bk, wv, bv, *, q_scale, out_dtype):
    n, d = xq.shape
    tr = _pick_tile(n)
    row_spec = pl.BlockSpec((tr, d), lambda r: (r, 0))
    w_spec = pl.BlockSpec((d, d), lambda r: (0, 0))
    b_spec = pl.BlockSpec((1, d), lambda r: (0, 0))
    out_sds = jax.ShapeDtypeStruct((n, d), out_dtype)
    return pl.pallas_call(
        partial(_qkv_proj_kernel, q_scale=q_scale),
        out_shape=(out_sds, out_sds, out_sds),
        grid_spec=pltpu.PrefetchScalarGridSpec(
            num_scalar_prefetch=0,
            grid=(n // tr,),
            in_specs=[row_spec, row_spec, row_spec,
                      w_spec, b_spec, w_spec, b_spec, w_spec, b_spec],
            out_specs=[row_spec, row_spec, row_spec]),
        compiler_params=pltpu.CompilerParams(
            dimension_semantics=("parallel",),
            vmem_limit_bytes=_VMEM_LIMIT),
    )(xq, xk, xv, wq, bq, wk, bk, wv, bv)


# ----------------------- stage 2: flash-style attention ----------------------

def _flash_attn_kernel(q_ref, k_ref, v_ref, o_ref, m_ref, l_ref, acc_ref,
                       *, compute_dtype):
    ki = pl.program_id(3)

    @pl.when(ki == 0)
    def _():
        m_ref[...] = jnp.full(m_ref.shape, -jnp.inf, jnp.float32)
        l_ref[...] = jnp.zeros(l_ref.shape, jnp.float32)
        acc_ref[...] = jnp.zeros(acc_ref.shape, jnp.float32)

    q = q_ref[...]                      # (TQ, d_k), already scaled by 1/sqrt(d_k)
    k = k_ref[...]                      # (TKV, d_k)
    # scores = q @ k^T without materializing a transpose: contract the last dims.
    s = lax.dot_general(q, k, (((1,), (1,)), ((), ())),
                        preferred_element_type=jnp.float32)   # (TQ, TKV) f32

    m_prev = m_ref[...]
    m_new = jnp.maximum(m_prev, jnp.max(s, axis=-1, keepdims=True))
    alpha = jnp.exp(m_prev - m_new)
    p = jnp.exp(s - m_new)
    l_ref[...] = alpha * l_ref[...] + jnp.sum(p, axis=-1, keepdims=True)
    acc_ref[...] = alpha * acc_ref[...] + jnp.dot(
        p.astype(compute_dtype), v_ref[...], preferred_element_type=jnp.float32)
    m_ref[...] = m_new

    @pl.when(ki == pl.num_programs(3) - 1)
    def _():
        o_ref[...] = (acc_ref[...] *
                      pl.reciprocal(l_ref[...], approx=True)).astype(o_ref.dtype)


def _flash_attention(q, k, v, *, compute_dtype):
    b, h, s, d_k = q.shape
    tq = _pick_tile(s)
    tkv = _pick_tile(s)
    q_spec = pl.BlockSpec((None, None, tq, d_k), lambda bi, hi, qi, ki: (bi, hi, qi, 0))
    kv_spec = pl.BlockSpec((None, None, tkv, d_k), lambda bi, hi, qi, ki: (bi, hi, ki, 0))
    o_spec = pl.BlockSpec((None, None, tq, d_k), lambda bi, hi, qi, ki: (bi, hi, qi, 0))
    return pl.pallas_call(
        partial(_flash_attn_kernel, compute_dtype=compute_dtype),
        out_shape=jax.ShapeDtypeStruct((b, h, s, d_k), compute_dtype),
        grid_spec=pltpu.PrefetchScalarGridSpec(
            num_scalar_prefetch=0,
            grid=(b, h, s // tq, s // tkv),
            in_specs=[q_spec, kv_spec, kv_spec],
            out_specs=o_spec,
            scratch_shapes=[pltpu.VMEM((tq, 1), jnp.float32),    # running max m
                            pltpu.VMEM((tq, 1), jnp.float32),    # running sum l
                            pltpu.VMEM((tq, d_k), jnp.float32)]  # accumulator
        ),
        compiler_params=pltpu.CompilerParams(
            dimension_semantics=("parallel", "parallel", "parallel", "arbitrary"),
            vmem_limit_bytes=_VMEM_LIMIT),
    )(q, k, v)


# ----------------------- stage 3: output projection ---------------------------

def _out_proj_kernel(x_ref, w_ref, b_ref, o_ref):
    y = jnp.dot(x_ref[...], w_ref[...], preferred_element_type=jnp.float32)
    o_ref[...] = (y + b_ref[...].astype(jnp.float32)).astype(o_ref.dtype)


def _out_projection(x, w, b, *, out_dtype):
    n, d = x.shape
    tr = _pick_tile(n)
    row_spec = pl.BlockSpec((tr, d), lambda r: (r, 0))
    return pl.pallas_call(
        _out_proj_kernel,
        out_shape=jax.ShapeDtypeStruct((n, d), out_dtype),
        grid_spec=pltpu.PrefetchScalarGridSpec(
            num_scalar_prefetch=0,
            grid=(n // tr,),
            in_specs=[row_spec,
                      pl.BlockSpec((d, d), lambda r: (0, 0)),
                      pl.BlockSpec((1, d), lambda r: (0, 0))],
            out_specs=row_spec),
        compiler_params=pltpu.CompilerParams(
            dimension_semantics=("parallel",),
            vmem_limit_bytes=_VMEM_LIMIT),
    )(x, w, b)


# ------------------------------- public wrapper -------------------------------

def multi_headed_attention(x_query, x_key, x_value, params, *, num_heads,
                           compute_dtype=jnp.bfloat16):
    """params: dict with 'wq','bq','wk','bk','wv','bv','wo','bo'.
    Weights are (D_in, D_out) (already transposed vs torch Linear.weight),
    biases are (1, D).  compute_dtype controls the MXU operand dtype
    (bf16 default; accumulation and softmax stay f32)."""
    B, S, D = x_query.shape
    assert D % num_heads == 0
    d_k = D // num_heads
    out_dtype = x_query.dtype
    cd = compute_dtype

    # Cast MXU operands once at the boundary (halves activation/weight DMA on
    # the bf16 path); biases stay f32 and are added after f32 accumulation.
    xq = x_query.astype(cd).reshape(B * S, D)
    xk = x_key.astype(cd).reshape(B * S, D)
    xv = x_value.astype(cd).reshape(B * S, D)
    wq, wk, wv, wo = (params[n].astype(cd) for n in ("wq", "wk", "wv", "wo"))
    bq, bk, bv, bo = (params[n].astype(jnp.float32) for n in ("bq", "bk", "bv", "bo"))

    # Stage 1: fused Q/K/V projection (1/sqrt(d_k) folded into Q).
    q, k, v = _qkv_projection(xq, xk, xv, wq, bq, wk, bk, wv, bv,
                              q_scale=1.0 / math.sqrt(d_k), out_dtype=cd)

    # Head split (B*S, D) -> (B, H, S, d_k) at the XLA level so every kernel
    # block is a full-last-dim tile (no in-kernel relayouts / lane-narrow slices).
    def split_heads(t):
        return t.reshape(B, S, num_heads, d_k).transpose(0, 2, 1, 3)

    qh, kh, vh = split_heads(q), split_heads(k), split_heads(v)

    # Stage 2: flash attention over a (B, H, q-tile, kv-tile) grid.
    ctx = _flash_attention(qh, kh, vh, compute_dtype=cd)

    # Concat heads back: (B, H, S, d_k) -> (B*S, D).
    ctx = ctx.transpose(0, 2, 1, 3).reshape(B * S, D)

    # Stage 3: output projection.
    out = _out_projection(ctx, wo, bo, out_dtype=out_dtype)
    return out.reshape(B, S, D)


# ------------------------------ pure-JAX reference -----------------------------

def _reference(x_query, x_key, x_value, params, *, num_heads):
    """Mirrors the PyTorch forward (mask=None, dropout=0), full f32."""
    B, S, D = x_query.shape
    d_k = D // num_heads

    def lin(x, w, b):
        return x @ w + b  # w is (D_in, D_out)

    def split(x):  # (B,S,D) -> (B,h,S,d_k)
        return x.reshape(B, S, num_heads, d_k).transpose(0, 2, 1, 3)

    q = split(lin(x_query, params["wq"], params["bq"]))
    k = split(lin(x_key, params["wk"], params["bk"]))
    v = split(lin(x_value, params["wv"], params["bv"]))

    scores = jnp.einsum("bhqd,bhkd->bhqk", q, k) / math.sqrt(d_k)
    p = jax.nn.softmax(scores, axis=-1)
    ctx = jnp.einsum("bhqk,bhkd->bhqd", p, v)
    ctx = ctx.transpose(0, 2, 1, 3).reshape(B, S, D)
    return lin(ctx, params["wo"], params["bo"])


if __name__ == "__main__":
    # batch, seq, d_embed, heads  (d_k = 128 -> lane-dense head tiles)
    B, S, D, H = 2, 128, 256, 2

    key = jax.random.PRNGKey(0)
    keys = jax.random.split(key, 11)

    # deterministic parameter init (synthetic; mimics nn.Linear uniform init)
    bound = 1.0 / math.sqrt(D)

    def u(k, shape):
        return jax.random.uniform(k, shape, jnp.float32, -bound, bound)

    params = {
        "wq": u(keys[0], (D, D)), "bq": u(keys[1], (1, D)),
        "wk": u(keys[2], (D, D)), "bk": u(keys[3], (1, D)),
        "wv": u(keys[4], (D, D)), "bv": u(keys[5], (1, D)),
        "wo": u(keys[6], (D, D)), "bo": u(keys[7], (1, D)),
    }

    x_query = jax.random.normal(keys[8], (B, S, D), jnp.float32)
    x_key = jax.random.normal(keys[9], (B, S, D), jnp.float32)
    x_value = jax.random.normal(keys[10], (B, S, D), jnp.float32)

    ref = _reference(x_query, x_key, x_value, params, num_heads=H)

    # f32 compute path: tight correctness check (approx reciprocal ~1e-4 rel err).
    out_f32 = multi_headed_attention(x_query, x_key, x_value, params,
                                     num_heads=H, compute_dtype=jnp.float32)
    out_f32 = jax.block_until_ready(out_f32)
    assert out_f32.shape == (B, S, D)
    assert jnp.allclose(out_f32, ref, atol=2e-3, rtol=2e-3), "f32 path mismatch"

    # bf16 MXU-operand path (default perf config): looser check.
    out_bf16 = multi_headed_attention(x_query, x_key, x_value, params,
                                      num_heads=H, compute_dtype=jnp.bfloat16)
    out_bf16 = jax.block_until_ready(out_bf16)
    assert out_bf16.shape == (B, S, D)
    assert jnp.allclose(out_bf16, ref, atol=5e-2, rtol=5e-2), "bf16 path mismatch"

    print("KERNEL_OK")
</pallas_src>

<mosaic_0001>
module attributes {stable_mosaic.version = 11 : i64} {
  func.func @_qkv_proj_kernel(%arg0: i32, %arg1: memref<256x256xf32, #tpu.memory_space<vmem>>, %arg2: memref<256x256xf32, #tpu.memory_space<vmem>>, %arg3: memref<256x256xf32, #tpu.memory_space<vmem>>, %arg4: memref<256x256xf32, #tpu.memory_space<vmem>>, %arg5: memref<1x256xf32, #tpu.memory_space<vmem>>, %arg6: memref<256x256xf32, #tpu.memory_space<vmem>>, %arg7: memref<1x256xf32, #tpu.memory_space<vmem>>, %arg8: memref<256x256xf32, #tpu.memory_space<vmem>>, %arg9: memref<1x256xf32, #tpu.memory_space<vmem>>, %arg10: memref<256x256xf32, #tpu.memory_space<vmem>>, %arg11: memref<256x256xf32, #tpu.memory_space<vmem>>, %arg12: memref<256x256xf32, #tpu.memory_space<vmem>>) attributes {dimension_semantics = [#tpu.dimension_semantics<parallel>], iteration_bounds = array<i64: 1>, scalar_prefetch = 0 : i64, scratch_operands = 0 : i64, tpu.core_type = #tpu.core_type<tc>, window_params = [{transform_indices = @transform_0, window_bounds = array<i64: 256, 256>}, {transform_indices = @transform_1, window_bounds = array<i64: 256, 256>}, {transform_indices = @transform_2, window_bounds = array<i64: 256, 256>}, {pipeline_mode = #tpu.pipeline_mode<synchronous>, transform_indices = @transform_3, window_bounds = array<i64: 256, 256>}, {pipeline_mode = #tpu.pipeline_mode<synchronous>, transform_indices = @transform_4, window_bounds = array<i64: 1, 256>}, {pipeline_mode = #tpu.pipeline_mode<synchronous>, transform_indices = @transform_5, window_bounds = array<i64: 256, 256>}, {pipeline_mode = #tpu.pipeline_mode<synchronous>, transform_indices = @transform_6, window_bounds = array<i64: 1, 256>}, {pipeline_mode = #tpu.pipeline_mode<synchronous>, transform_indices = @transform_7, window_bounds = array<i64: 256, 256>}, {pipeline_mode = #tpu.pipeline_mode<synchronous>, transform_indices = @transform_8, window_bounds = array<i64: 1, 256>}, {transform_indices = @transform_9, window_bounds = array<i64: 256, 256>}, {transform_indices = @transform_10, window_bounds = array<i64: 256, 256>}, {transform_indices = @transform_11, window_bounds = array<i64: 256, 256>}]} {
    %c0 = arith.constant 0 : index
    %c0_0 = arith.constant 0 : index
    %0 = vector.load %arg1[%c0, %c0_0] : memref<256x256xf32, #tpu.memory_space<vmem>>, vector<256x256xf32>
    %c0_1 = arith.constant 0 : index
    %c0_2 = arith.constant 0 : index
    %1 = vector.load %arg4[%c0_1, %c0_2] : memref<256x256xf32, #tpu.memory_space<vmem>>, vector<256x256xf32>
    %cst = arith.constant dense<0.000000e+00> : vector<256x256xf32>
    %2 = tpu.matmul %0, %1, %cst {dimension_numbers = #tpu.dot_dimension_numbers<[1], [0], [0], [1], [0, 0, 1, 1], [], []>} : vector<256x256xf32>, vector<256x256xf32>, vector<256x256xf32> -> vector<256x256xf32>
    %c0_3 = arith.constant 0 : index
    %c0_4 = arith.constant 0 : index
    %3 = vector.load %arg5[%c0_3, %c0_4] : memref<1x256xf32, #tpu.memory_space<vmem>>, vector<1x256xf32>
    %4 = vector.broadcast %3 : vector<1x256xf32> to vector<256x256xf32>
    %5 = arith.addf %2, %4 : vector<256x256xf32>
    %cst_5 = arith.constant 0.0883883461 : f32
    %6 = vector.broadcast %cst_5 : f32 to vector<256x256xf32>
    %7 = arith.mulf %5, %6 : vector<256x256xf32>
    %c0_6 = arith.constant 0 : index
    %c0_7 = arith.constant 0 : index
    %8 = vector.load %arg2[%c0_6, %c0_7] : memref<256x256xf32, #tpu.memory_space<vmem>>, vector<256x256xf32>
    %c0_8 = arith.constant 0 : index
    %c0_9 = arith.constant 0 : index
    %9 = vector.load %arg6[%c0_8, %c0_9] : memref<256x256xf32, #tpu.memory_space<vmem>>, vector<256x256xf32>
    %cst_10 = arith.constant dense<0.000000e+00> : vector<256x256xf32>
    %10 = tpu.matmul %8, %9, %cst_10 {dimension_numbers = #tpu.dot_dimension_numbers<[1], [0], [0], [1], [0, 0, 1, 1], [], []>} : vector<256x256xf32>, vector<256x256xf32>, vector<256x256xf32> -> vector<256x256xf32>
    %c0_11 = arith.constant 0 : index
    %c0_12 = arith.constant 0 : index
    %11 = vector.load %arg7[%c0_11, %c0_12] : memref<1x256xf32, #tpu.memory_space<vmem>>, vector<1x256xf32>
    %12 = vector.broadcast %11 : vector<1x256xf32> to vector<256x256xf32>
    %13 = arith.addf %10, %12 : vector<256x256xf32>
    %c0_13 = arith.constant 0 : index
    %c0_14 = arith.constant 0 : index
    %14 = vector.load %arg3[%c0_13, %c0_14] : memref<256x256xf32, #tpu.memory_space<vmem>>, vector<256x256xf32>
    %c0_15 = arith.constant 0 : index
    %c0_16 = arith.constant 0 : index
    %15 = vector.load %arg8[%c0_15, %c0_16] : memref<256x256xf32, #tpu.memory_space<vmem>>, vector<256x256xf32>
    %cst_17 = arith.constant dense<0.000000e+00> : vector<256x256xf32>
    %16 = tpu.matmul %14, %15, %cst_17 {dimension_numbers = #tpu.dot_dimension_numbers<[1], [0], [0], [1], [0, 0, 1, 1], [], []>} : vector<256x256xf32>, vector<256x256xf32>, vector<256x256xf32> -> vector<256x256xf32>
    %c0_18 = arith.constant 0 : index
    %c0_19 = arith.constant 0 : index
    %17 = vector.load %arg9[%c0_18, %c0_19] : memref<1x256xf32, #tpu.memory_space<vmem>>, vector<1x256xf32>
    %18 = vector.broadcast %17 : vector<1x256xf32> to vector<256x256xf32>
    %19 = arith.addf %16, %18 : vector<256x256xf32>
    %c0_20 = arith.constant 0 : index
    %c0_21 = arith.constant 0 : index
    %20 = vector.load %arg10[%c0_20, %c0_21] : memref<256x256xf32, #tpu.memory_space<vmem>>, vector<256x256xf32>
    tpu.vector_store %arg10[%c0_20, %c0_21], %7 {strides = array<i32>} : memref<256x256xf32, #tpu.memory_space<vmem>>, vector<256x256xf32>,
    %c0_22 = arith.constant 0 : index
    %c0_23 = arith.constant 0 : index
    %21 = vector.load %arg11[%c0_22, %c0_23] : memref<256x256xf32, #tpu.memory_space<vmem>>, vector<256x256xf32>
    tpu.vector_store %arg11[%c0_22, %c0_23], %13 {strides = array<i32>} : memref<256x256xf32, #tpu.memory_space<vmem>>, vector<256x256xf32>,
    %c0_24 = arith.constant 0 : index
    %c0_25 = arith.constant 0 : index
    %22 = vector.load %arg12[%c0_24, %c0_25] : memref<256x256xf32, #tpu.memory_space<vmem>>, vector<256x256xf32>
    tpu.vector_store %arg12[%c0_24, %c0_25], %19 {strides = array<i32>} : memref<256x256xf32, #tpu.memory_space<vmem>>, vector<256x256xf32>,
    return
  }
  func.func @transform_0(%arg0: i32) -> (i32, i32) {
    %c0_i32 = arith.constant 0 : i32
    %c0_i32_0 = arith.constant 0 : i32
    return %arg0, %c0_i32 : i32, i32
  }
  func.func @transform_1(%arg0: i32) -> (i32, i32) {
    %c0_i32 = arith.constant 0 : i32
    %c0_i32_0 = arith.constant 0 : i32
    return %arg0, %c0_i32 : i32, i32
  }
  func.func @transform_2(%arg0: i32) -> (i32, i32) {
    %c0_i32 = arith.constant 0 : i32
    %c0_i32_0 = arith.constant 0 : i32
    return %arg0, %c0_i32 : i32, i32
  }
  func.func @transform_3(%arg0: i32) -> (i32, i32) {
    %c0_i32 = arith.constant 0 : i32
    %c0_i32_0 = arith.constant 0 : i32
    %c0_i32_1 = arith.constant 0 : i32
    return %c0_i32, %c0_i32_0 : i32, i32
  }
  func.func @transform_4(%arg0: i32) -> (i32, i32) {
    %c0_i32 = arith.constant 0 : i32
    %c0_i32_0 = arith.constant 0 : i32
    %c0_i32_1 = arith.constant 0 : i32
    return %c0_i32, %c0_i32_0 : i32, i32
  }
  func.func @transform_5(%arg0: i32) -> (i32, i32) {
    %c0_i32 = arith.constant 0 : i32
    %c0_i32_0 = arith.constant 0 : i32
    %c0_i32_1 = arith.constant 0 : i32
    return %c0_i32, %c0_i32_0 : i32, i32
  }
  func.func @transform_6(%arg0: i32) -> (i32, i32) {
    %c0_i32 = arith.constant 0 : i32
    %c0_i32_0 = arith.constant 0 : i32
    %c0_i32_1 = arith.constant 0 : i32
    return %c0_i32, %c0_i32_0 : i32, i32
  }
  func.func @transform_7(%arg0: i32) -> (i32, i32) {
    %c0_i32 = arith.constant 0 : i32
    %c0_i32_0 = arith.constant 0 : i32
    %c0_i32_1 = arith.constant 0 : i32
    return %c0_i32, %c0_i32_0 : i32, i32
  }
  func.func @transform_8(%arg0: i32) -> (i32, i32) {
    %c0_i32 = arith.constant 0 : i32
    %c0_i32_0 = arith.constant 0 : i32
    %c0_i32_1 = arith.constant 0 : i32
    return %c0_i32, %c0_i32_0 : i32, i32
  }
  func.func @transform_9(%arg0: i32) -> (i32, i32) {
    %c0_i32 = arith.constant 0 : i32
    %c0_i32_0 = arith.constant 0 : i32
    return %arg0, %c0_i32 : i32, i32
  }
  func.func @transform_10(%arg0: i32) -> (i32, i32) {
    %c0_i32 = arith.constant 0 : i32
    %c0_i32_0 = arith.constant 0 : i32
    return %arg0, %c0_i32 : i32, i32
  }
  func.func @transform_11(%arg0: i32) -> (i32, i32) {
    %c0_i32 = arith.constant 0 : i32
    %c0_i32_0 = arith.constant 0 : i32
    return %arg0, %c0_i32 : i32, i32
  }
}

</mosaic_0001>

<llo_original>
// kernel: tpu_custom_call.1
$region0: #{tpu_custom_call.1}
  #allocation0 [shape = 'u32[]', space=smem, size = 0x4, offset = 0x4, fixed_abs, tag = 'smem constant byte address 0x4 - core index']
  #allocation1 [shape = 'u32[144,128]{1,0:T(1,128)}', space=vmem, size = 0x12000, scoped, tag = 'internal scratch']
  %s0 = inlined_call_operand.hbm [shape: f32[256,256], index: 0, kind: input, shape index: {}]
  %s1 = inlined_call_operand.hbm [shape: f32[256,256], index: 1, kind: input, shape index: {}]
  %s2 = inlined_call_operand.hbm [shape: f32[256,256], index: 2, kind: input, shape index: {}]
  %s3 = inlined_call_operand.hbm [shape: f32[256,256], index: 3, kind: input, shape index: {}]
  %s4 = inlined_call_operand.hbm [shape: f32[1,256], index: 4, kind: input, shape index: {}]
  %s5 = inlined_call_operand.hbm [shape: f32[256,256], index: 5, kind: input, shape index: {}]
  %s6 = inlined_call_operand.hbm [shape: f32[1,256], index: 6, kind: input, shape index: {}]
  %s7 = inlined_call_operand.hbm [shape: f32[256,256], index: 7, kind: input, shape index: {}]
  %s8 = inlined_call_operand.hbm [shape: f32[1,256], index: 8, kind: input, shape index: {}]
  %s9 = inlined_call_operand.hbm [shape: f32[256,256], index: 9, kind: output, shape index: {0}]
  %s10 = inlined_call_operand.hbm [shape: f32[256,256], index: 10, kind: output, shape index: {1}]
  %s11 = inlined_call_operand.hbm [shape: f32[256,256], index: 11, kind: output, shape index: {2}]
  %12 = xla_tuple %s9, %s10, %s11
  %s13 = sld [smem:[#allocation0]]
  $region98: #{tpu_custom_call.1} parent=0
    _
  %s15 = ssub.s32 1, %s13
  %s16 = scalar_select 0, %s15, %s13
  $region1: #{tpu_custom_call.1} parent=0
    #allocation2 [shape = 'u8[262144]{0}', space=vmem, size = 0x40000, scoped, tag = 'input window, operand 0, single buffered']
    #allocation3 [shape = 's32[1]{0}', space=sflag, size = 0x4, scoped, tag = 'scoped memory for tpu_custom_call.1']
    #allocation4 [shape = 's32[1]{0}', space=sflag, size = 0x4, scoped, tag = 'scoped memory for tpu_custom_call.1']
    #allocation5 [shape = 'u8[262144]{0}', space=vmem, size = 0x40000, scoped, tag = 'input window, operand 1, single buffered']
    #allocation6 [shape = 's32[1]{0}', space=sflag, size = 0x4, scoped, tag = 'scoped memory for tpu_custom_call.1']
    #allocation7 [shape = 'u8[262144]{0}', space=vmem, size = 0x40000, scoped, tag = 'input window, operand 2, single buffered']
    #allocation8 [shape = 'u8[262144]{0}', space=vmem, size = 0x40000, scoped, tag = 'input window, operand 3, single buffered']
    #allocation9 [shape = 's32[1]{0}', space=sflag, size = 0x4, scoped, tag = 'scoped memory for tpu_custom_call.1']
    #allocation10 [shape = 'u8[1024]{0}', space=vmem, size = 0x400, scoped, tag = 'input window, operand 4, single buffered']
    #allocation11 [shape = 'u8[262144]{0}', space=vmem, size = 0x40000, scoped, tag = 'input window, operand 5, single buffered']
    #allocation12 [shape = 's32[1]{0}', space=sflag, size = 0x4, scoped, tag = 'scoped memory for tpu_custom_call.1']
    #allocation13 [shape = 'u8[1024]{0}', space=vmem, size = 0x400, scoped, tag = 'input window, operand 6, single buffered']
    #allocation14 [shape = 'u8[262144]{0}', space=vmem, size = 0x40000, scoped, tag = 'input window, operand 7, single buffered']
    #allocation15 [shape = 's32[1]{0}', space=sflag, size = 0x4, scoped, tag = 'scoped memory for tpu_custom_call.1']
    #allocation16 [shape = 'u8[1024]{0}', space=vmem, size = 0x400, scoped, tag = 'input window, operand 8, single buffered']
    #allocation17 [shape = 'u8[262144]{0}', space=vmem, size = 0x40000, scoped, tag = 'output window, operand 0, single buffered']
    #allocation18 [shape = 'u8[262144]{0}', space=vmem, size = 0x40000, scoped, tag = 'output window, operand 1, single buffered']
    #allocation19 [shape = 's32[1]{0}', space=sflag, size = 0x4, scoped, tag = 'scoped memory for tpu_custom_call.1']
    #allocation20 [shape = 'u8[262144]{0}', space=vmem, size = 0x40000, scoped, tag = 'output window, operand 2, single buffered']
    %17 = vsyncpa [#allocation3], 0
    %18 = vsyncpa [#allocation6], 0
    %19 = vsyncpa [#allocation9], 0
    %20 = vsyncpa [#allocation12], 0
    %21 = vsyncpa [#allocation15], 0
    %22 = vsyncpa [#allocation4], 0
    %23 = vsyncpa [#allocation19], 0
    // Predicated region
    $region2: #{tpu_custom_call.1} parent=1 // pred_check
      _
    $region3: #{tpu_custom_call.1} parent=1 // pred_check_branch
      %25 = sbr.rel (0) target = $region5
    $region4: #{tpu_custom_call.1} parent=1 // pred_region
      %s27 = ssub.s32 8192, 8192
      %28 = vsyncadd [#allocation3], %s27
      %s29 = sshll.u32 [#allocation2], 4
      %s30 = int_to_ptr.vmem [resolvable:$true] %s29
      %35 = dma.hbm_to_vmem [thread:$0]  %s0, 8192, %s30, [#allocation3], 256, 256, 16
    $region5: #{tpu_custom_call.1} parent=1 // pred_fallthru
      _
    // Predicated region
    $region6: #{tpu_custom_call.1} parent=1 // pred_check
      _
    $region7: #{tpu_custom_call.1} parent=1 // pred_check_branch
      %37 = sbr.rel (0) target = $region9
    $region8: #{tpu_custom_call.1} parent=1 // pred_region
      %s39 = ssub.s32 8192, 8192
      %40 = vsyncadd [#allocation6], %s39
      %s41 = sshll.u32 [#allocation5], 4
      %s42 = int_to_ptr.vmem [resolvable:$true] %s41
      %47 = dma.hbm_to_vmem [thread:$0]  %s1, 8192, %s42, [#allocation6], 256, 256, 16
    $region9: #{tpu_custom_call.1} parent=1 // pred_fallthru
      _
    // Predicated region
    $region10: #{tpu_custom_call.1} parent=1 // pred_check
      _
    $region11: #{tpu_custom_call.1} parent=1 // pred_check_branch
      %49 = sbr.rel (0) target = $region13
    $region12: #{tpu_custom_call.1} parent=1 // pred_region
      %s51 = ssub.s32 8192, 8192
      %52 = vsyncadd [#allocation6], %s51
      %s53 = sshll.u32 [#allocation7], 4
      %s54 = int_to_ptr.vmem [resolvable:$true] %s53
      %59 = dma.hbm_to_vmem [thread:$0]  %s2, 8192, %s54, [#allocation6], 256, 256, 16
    $region13: #{tpu_custom_call.1} parent=1 // pred_fallthru
      _
    // Predicated region
    $region14: #{tpu_custom_call.1} parent=1 // pred_check
      _
    $region15: #{tpu_custom_call.1} parent=1 // pred_check_branch
      %61 = sbr.rel (0) target = $region17
    $region16: #{tpu_custom_call.1} parent=1 // pred_region
      %s63 = ssub.s32 8192, 8192
      %64 = vsyncadd [#allocation9], %s63
      %s65 = sshll.u32 [#allocation8], 4
      %s66 = int_to_ptr.vmem [resolvable:$true] %s65
      %71 = dma.hbm_to_vmem [thread:$0]  %s3, 8192, %s66, [#allocation9], 256, 256, 16
    $region17: #{tpu_custom_call.1} parent=1 // pred_fallthru
      _
    // Predicated region
    $region18: #{tpu_custom_call.1} parent=1 // pred_check
      _
    $region19: #{tpu_custom_call.1} parent=1 // pred_check_branch
      %73 = sbr.rel (0) target = $region21
    $region20: #{tpu_custom_call.1} parent=1 // pred_region
      %s75 = ssub.s32 32, 32
      %76 = vsyncadd [#allocation9], %s75
      %s78 = sshll.u32 [#allocation10], 4
      %s79 = int_to_ptr.vmem [resolvable:$true] %s78
      %81 = dma.hbm_to_vmem [thread:$0]  %s4, 32, %s79, [#allocation9]
    $region21: #{tpu_custom_call.1} parent=1 // pred_fallthru
      _
    // Predicated region
    $region22: #{tpu_custom_call.1} parent=1 // pred_check
      _
    $region23: #{tpu_custom_call.1} parent=1 // pred_check_branch
      %83 = sbr.rel (0) target = $region25
    $region24: #{tpu_custom_call.1} parent=1 // pred_region
      %s85 = ssub.s32 8192, 8192
      %86 = vsyncadd [#allocation12], %s85
      %s87 = sshll.u32 [#allocation11], 4
      %s88 = int_to_ptr.vmem [resolvable:$true] %s87
      %93 = dma.hbm_to_vmem [thread:$0]  %s5, 8192, %s88, [#allocation12], 256, 256, 16
    $region25: #{tpu_custom_call.1} parent=1 // pred_fallthru
      _
    // Predicated region
    $region26: #{tpu_custom_call.1} parent=1 // pred_check
      _
    $region27: #{tpu_custom_call.1} parent=1 // pred_check_branch
      %95 = sbr.rel (0) target = $region29
    $region28: #{tpu_custom_call.1} parent=1 // pred_region
      %s97 = ssub.s32 32, 32
      %98 = vsyncadd [#allocation12], %s97
      %s100 = sshll.u32 [#allocation13], 4
      %s101 = int_to_ptr.vmem [resolvable:$true] %s100
      %103 = dma.hbm_to_vmem [thread:$0]  %s6, 32, %s101, [#allocation12]
    $region29: #{tpu_custom_call.1} parent=1 // pred_fallthru
      _
    // Predicated region
    $region30: #{tpu_custom_call.1} parent=1 // pred_check
      _
    $region31: #{tpu_custom_call.1} parent=1 // pred_check_branch
      %105 = sbr.rel (0) target = $region33
    $region32: #{tpu_custom_call.1} parent=1 // pred_region
      %s107 = ssub.s32 8192, 8192
      %108 = vsyncadd [#allocation15], %s107
      %s109 = sshll.u32 [#allocation14], 4
      %s110 = int_to_ptr.vmem [resolvable:$true] %s109
      %115 = dma.hbm_to_vmem [thread:$0]  %s7, 8192, %s110, [#allocation15], 256, 256, 16
    $region33: #{tpu_custom_call.1} parent=1 // pred_fallthru
      _
    // Predicated region
    $region34: #{tpu_custom_call.1} parent=1 // pred_check
      _
    $region35: #{tpu_custom_call.1} parent=1 // pred_check_branch
      %117 = sbr.rel (0) target = $region37
    $region36: #{tpu_custom_call.1} parent=1 // pred_region
      %s119 = ssub.s32 32, 32
      %120 = vsyncadd [#allocation15], %s119
      %s122 = sshll.u32 [#allocation16], 4
      %s123 = int_to_ptr.vmem [resolvable:$true] %s122
      %125 = dma.hbm_to_vmem [thread:$0]  %s8, 32, %s123, [#allocation15]
    $region37: #{tpu_custom_call.1} parent=1 // pred_fallthru
      _
    // Predicated region
    $region38: #{tpu_custom_call.1} parent=1 // pred_check
      _
    $region39: #{tpu_custom_call.1} parent=1 // pred_check_branch
      %127 = sbr.rel (0) target = $region41
    $region40: #{tpu_custom_call.1} parent=1 // pred_region
      %128 = dma.done [#allocation3], 8192
    $region41: #{tpu_custom_call.1} parent=1 // pred_fallthru
      _
    // Predicated region
    $region42: #{tpu_custom_call.1} parent=1 // pred_check
      _
    $region43: #{tpu_custom_call.1} parent=1 // pred_check_branch
      %130 = sbr.rel (0) target = $region45
    $region44: #{tpu_custom_call.1} parent=1 // pred_region
      %131 = dma.done [#allocation6], 8192
    $region45: #{tpu_custom_call.1} parent=1 // pred_fallthru
      _
    // Predicated region
    $region46: #{tpu_custom_call.1} parent=1 // pred_check
      _
    $region47: #{tpu_custom_call.1} parent=1 // pred_check_branch
      %133 = sbr.rel (0) target = $region49
    $region48: #{tpu_custom_call.1} parent=1 // pred_region
      %134 = dma.done [#allocation6], 8192
    $region49: #{tpu_custom_call.1} parent=1 // pred_fallthru
      _
    // Predicated region
    $region50: #{tpu_custom_call.1} parent=1 // pred_check
      _
    $region51: #{tpu_custom_call.1} parent=1 // pred_check_branch
      %136 = sbr.rel (0) target = $region53
    $region52: #{tpu_custom_call.1} parent=1 // pred_region
      %137 = dma.done [#allocation9], 8192
    $region53: #{tpu_custom_call.1} parent=1 // pred_fallthru
      _
    // Predicated region
    $region54: #{tpu_custom_call.1} parent=1 // pred_check
      _
    $region55: #{tpu_custom_call.1} parent=1 // pred_check_branch
      %139 = sbr.rel (0) target = $region57
    $region56: #{tpu_custom_call.1} parent=1 // pred_region
      %140 = dma.done [#allocation9], 32
    $region57: #{tpu_custom_call.1} parent=1 // pred_fallthru
      _
    // Predicated region
    $region58: #{tpu_custom_call.1} parent=1 // pred_check
      _
    $region59: #{tpu_custom_call.1} parent=1 // pred_check_branch
      %142 = sbr.rel (0) target = $region61
    $region60: #{tpu_custom_call.1} parent=1 // pred_region
      %143 = dma.done [#allocation12], 8192
    $region61: #{tpu_custom_call.1} parent=1 // pred_fallthru
      _
    // Predicated region
    $region62: #{tpu_custom_call.1} parent=1 // pred_check
      _
    $region63: #{tpu_custom_call.1} parent=1 // pred_check_branch
      %145 = sbr.rel (0) target = $region65
    $region64: #{tpu_custom_call.1} parent=1 // pred_region
      %146 = dma.done [#allocation12], 32
    $region65: #{tpu_custom_call.1} parent=1 // pred_fallthru
      _
    // Predicated region
    $region66: #{tpu_custom_call.1} parent=1 // pred_check
      _
    $region67: #{tpu_custom_call.1} parent=1 // pred_check_branch
      %148 = sbr.rel (0) target = $region69
    $region68: #{tpu_custom_call.1} parent=1 // pred_region
      %149 = dma.done [#allocation15], 8192
    $region69: #{tpu_custom_call.1} parent=1 // pred_fallthru
      _
    // Predicated region
    $region70: #{tpu_custom_call.1} parent=1 // pred_check
      _
    $region71: #{tpu_custom_call.1} parent=1 // pred_check_branch
      %151 = sbr.rel (0) target = $region73
    $region72: #{tpu_custom_call.1} parent=1 // pred_region
      %152 = dma.done [#allocation15], 32
    $region73: #{tpu_custom_call.1} parent=1 // pred_fallthru
      _
    %v153 = vld [vmem:[#allocation2] sm:$0xff]
    %v154 = vld [vmem:[#allocation2 + $0x8] sm:$0xff]
    %v155 = vld [vmem:[#allocation2 + $0x10] sm:$0xff]
    %v156 = vld [vmem:[#allocation2 + $0x18] sm:$0xff]
    %v157 = vld [vmem:[#allocation2 + $0x20] sm:$0xff]
    %v158 = vld [vmem:[#allocation2 + $0x28] sm:$0xff]
    %v159 = vld [vmem:[#allocation2 + $0x30] sm:$0xff]
    %v160 = vld [vmem:[#allocation2 + $0x38] sm:$0xff]
    %v161 = vld [vmem:[#allocation2 + $0x40] sm:$0xff]
    %v162 = vld [vmem:[#allocation2 + $0x48] sm:$0xff]
    %v163 = vld [vmem:[#allocation2 + $0x50] sm:$0xff]
    %v164 = vld [vmem:[#allocation2 + $0x58] sm:$0xff]
    %v165 = vld [vmem:[#allocation2 + $0x60] sm:$0xff]
    %v166 = vld [vmem:[#allocation2 + $0x68] sm:$0xff]
    %v167 = vld [vmem:[#allocation2 + $0x70] sm:$0xff]
    %v168 = vld [vmem:[#allocation2 + $0x78] sm:$0xff]
    %v169 = vld [vmem:[#allocation2 + $0x80] sm:$0xff]
    %v170 = vld [vmem:[#allocation2 + $0x88] sm:$0xff]
    %v171 = vld [vmem:[#allocation2 + $0x90] sm:$0xff]
    %v172 = vld [vmem:[#allocation2 + $0x98] sm:$0xff]
    %v173 = vld [vmem:[#allocation2 + $0xa0] sm:$0xff]
    %v174 = vld [vmem:[#allocation2 + $0xa8] sm:$0xff]
    %v175 = vld [vmem:[#allocation2 + $0xb0] sm:$0xff]
    %v176 = vld [vmem:[#allocation2 + $0xb8] sm:$0xff]
    %v177 = vld [vmem:[#allocation2 + $0xc0] sm:$0xff]
    %v178 = vld [vmem:[#allocation2 + $0xc8] sm:$0xff]
    %v179 = vld [vmem:[#allocation2 + $0xd0] sm:$0xff]
    %v180 = vld [vmem:[#allocation2 + $0xd8] sm:$0xff]
    %v181 = vld [vmem:[#allocation2 + $0xe0] sm:$0xff]
    %v182 = vld [vmem:[#allocation2 + $0xe8] sm:$0xff]
    %v183 = vld [vmem:[#allocation2 + $0xf0] sm:$0xff]
    %v184 = vld [vmem:[#allocation2 + $0xf8] sm:$0xff]
    %v185 = vld [vmem:[#allocation2 + $0x100] sm:$0xff]
    %v186 = vld [vmem:[#allocation2 + $0x108] sm:$0xff]
    %v187 = vld [vmem:[#allocation2 + $0x110] sm:$0xff]
    %v188 = vld [vmem:[#allocation2 + $0x118] sm:$0xff]
    %v189 = vld [vmem:[#allocation2 + $0x120] sm:$0xff]
    %v190 = vld [vmem:[#allocation2 + $0x128] sm:$0xff]
    %v191 = vld [vmem:[#allocation2 + $0x130] sm:$0xff]
    %v192 = vld [vmem:[#allocation2 + $0x138] sm:$0xff]
    %v193 = vld [vmem:[#allocation2 + $0x140] sm:$0xff]
    %v194 = vld [vmem:[#allocation2 + $0x148] sm:$0xff]
    %v195 = vld [vmem:[#allocation2 + $0x150] sm:$0xff]
    %v196 = vld [vmem:[#allocation2 + $0x158] sm:$0xff]
    %v197 = vld [vmem:[#allocation2 + $0x160] sm:$0xff]
    %v198 = vld [vmem:[#allocation2 + $0x168] sm:$0xff]
    %v199 = vld [vmem:[#allocation2 + $0x170] sm:$0xff]
    %v200 = vld [vmem:[#allocation2 + $0x178] sm:$0xff]
    %v201 = vld [vmem:[#allocation2 + $0x180] sm:$0xff]
    %v202 = vld [vmem:[#allocation2 + $0x188] sm:$0xff]
    %v203 = vld [vmem:[#allocation2 + $0x190] sm:$0xff]
    %v204 = vld [vmem:[#allocation2 + $0x198] sm:$0xff]
    %v205 = vld [vmem:[#allocation2 + $0x1a0] sm:$0xff]
    %v206 = vld [vmem:[#allocation2 + $0x1a8] sm:$0xff]
    %v207 = vld [vmem:[#allocation2 + $0x1b0] sm:$0xff]
    %v208 = vld [vmem:[#allocation2 + $0x1b8] sm:$0xff]
    %v209 = vld [vmem:[#allocation2 + $0x1c0] sm:$0xff]
    %v210 = vld [vmem:[#allocation2 + $0x1c8] sm:$0xff]
    %v211 = vld [vmem:[#allocation2 + $0x1d0] sm:$0xff]
    %v212 = vld [vmem:[#allocation2 + $0x1d8] sm:$0xff]
    %v213 = vld [vmem:[#allocation2 + $0x1e0] sm:$0xff]
    %v214 = vld [vmem:[#allocation2 + $0x1e8] sm:$0xff]
    %v215 = vld [vmem:[#allocation2 + $0x1f0] sm:$0xff]
    %v216 = vld [vmem:[#allocation2 + $0x1f8] sm:$0xff]
    %v217 = vld [vmem:[#allocation8] sm:$0xff]
    %v218 = vld [vmem:[#allocation8 + $0x8] sm:$0xff]
    %v219 = vld [vmem:[#allocation8 + $0x10] sm:$0xff]
    %v220 = vld [vmem:[#allocation8 + $0x18] sm:$0xff]
    %v221 = vld [vmem:[#allocation8 + $0x20] sm:$0xff]
    %v222 = vld [vmem:[#allocation8 + $0x28] sm:$0xff]
    %v223 = vld [vmem:[#allocation8 + $0x30] sm:$0xff]
    %v224 = vld [vmem:[#allocation8 + $0x38] sm:$0xff]
    %v225 = vld [vmem:[#allocation8 + $0x40] sm:$0xff]
    %v226 = vld [vmem:[#allocation8 + $0x48] sm:$0xff]
    %v227 = vld [vmem:[#allocation8 + $0x50] sm:$0xff]
    %v228 = vld [vmem:[#allocation8 + $0x58] sm:$0xff]
    %v229 = vld [vmem:[#allocation8 + $0x60] sm:$0xff]
    %v230 = vld [vmem:[#allocation8 + $0x68] sm:$0xff]
    %v231 = vld [vmem:[#allocation8 + $0x70] sm:$0xff]
    %v232 = vld [vmem:[#allocation8 + $0x78] sm:$0xff]
    %v233 = vld [vmem:[#allocation8 + $0x80] sm:$0xff]
    %v234 = vld [vmem:[#allocation8 + $0x88] sm:$0xff]
    %v235 = vld [vmem:[#allocation8 + $0x90] sm:$0xff]
    %v236 = vld [vmem:[#allocation8 + $0x98] sm:$0xff]
    %v237 = vld [vmem:[#allocation8 + $0xa0] sm:$0xff]
    %v238 = vld [vmem:[#allocation8 + $0xa8] sm:$0xff]
    %v239 = vld [vmem:[#allocation8 + $0xb0] sm:$0xff]
    %v240 = vld [vmem:[#allocation8 + $0xb8] sm:$0xff]
    %v241 = vld [vmem:[#allocation8 + $0xc0] sm:$0xff]
    %v242 = vld [vmem:[#allocation8 + $0xc8] sm:$0xff]
    %v243 = vld [vmem:[#allocation8 + $0xd0] sm:$0xff]
    %v244 = vld [vmem:[#allocation8 + $0xd8] sm:$0xff]
    %v245 = vld [vmem:[#allocation8 + $0xe0] sm:$0xff]
    %v246 = vld [vmem:[#allocation8 + $0xe8] sm:$0xff]
    %v247 = vld [vmem:[#allocation8 + $0xf0] sm:$0xff]
    %v248 = vld [vmem:[#allocation8 + $0xf8] sm:$0xff]
    %v249 = vld [vmem:[#allocation8 + $0x100] sm:$0xff]
    %v250 = vld [vmem:[#allocation8 + $0x108] sm:$0xff]
    %v251 = vld [vmem:[#allocation8 + $0x110] sm:$0xff]
    %v252 = vld [vmem:[#allocation8 + $0x118] sm:$0xff]
    %v253 = vld [vmem:[#allocation8 + $0x120] sm:$0xff]
    %v254 = vld [vmem:[#allocation8 + $0x128] sm:$0xff]
    %v255 = vld [vmem:[#allocation8 + $0x130] sm:$0xff]
    %v256 = vld [vmem:[#allocation8 + $0x138] sm:$0xff]
    %v257 = vld [vmem:[#allocation8 + $0x140] sm:$0xff]
    %v258 = vld [vmem:[#allocation8 + $0x148] sm:$0xff]
    %v259 = vld [vmem:[#allocation8 + $0x150] sm:$0xff]
    %v260 = vld [vmem:[#allocation8 + $0x158] sm:$0xff]
    %v261 = vld [vmem:[#allocation8 + $0x160] sm:$0xff]
    %v262 = vld [vmem:[#allocation8 + $0x168] sm:$0xff]
    %v263 = vld [vmem:[#allocation8 + $0x170] sm:$0xff]
    %v264 = vld [vmem:[#allocation8 + $0x178] sm:$0xff]
    %v265 = vld [vmem:[#allocation8 + $0x180] sm:$0xff]
    %v266 = vld [vmem:[#allocation8 + $0x188] sm:$0xff]
    %v267 = vld [vmem:[#allocation8 + $0x190] sm:$0xff]
    %v268 = vld [vmem:[#allocation8 + $0x198] sm:$0xff]
    %v269 = vld [vmem:[#allocation8 + $0x1a0] sm:$0xff]
    %v270 = vld [vmem:[#allocation8 + $0x1a8] sm:$0xff]
    %v271 = vld [vmem:[#allocation8 + $0x1b0] sm:$0xff]
    %v272 = vld [vmem:[#allocation8 + $0x1b8] sm:$0xff]
    %v273 = vld [vmem:[#allocation8 + $0x1c0] sm:$0xff]
    %v274 = vld [vmem:[#allocation8 + $0x1c8] sm:$0xff]
    %v275 = vld [vmem:[#allocation8 + $0x1d0] sm:$0xff]
    %v276 = vld [vmem:[#allocation8 + $0x1d8] sm:$0xff]
    %v277 = vld [vmem:[#allocation8 + $0x1e0] sm:$0xff]
    %v278 = vld [vmem:[#allocation8 + $0x1e8] sm:$0xff]
    %v279 = vld [vmem:[#allocation8 + $0x1f0] sm:$0xff]
    %v280 = vld [vmem:[#allocation8 + $0x1f8] sm:$0xff]
    %v281 = vld [vmem:[#allocation10] sm:$0x3]
    %v283 = vlaneseq
    %v284 = vshrl.u32 %v283, 7
    %v285 = vsub.s32 0, %v284
    %v286 = vrot.slane %v281, %v285
    %v287 = vlaneseq
    %v288 = vshrl.u32 %v287, 7
    %v289 = vsub.s32 1, %v288
    %v290 = vrot.slane %v281, %v289
    %293 = vmatprep.subr.mxu0 %v218
    %294 = vmatpush1.msra.mxu0 %v217
    %295 = vmatprep.subr.mxu0 %v220
    %296 = vmatpush1.msra.mxu0 %v219
    %297 = vmatprep.subr.mxu0 %v222
    %298 = vmatpush1.msra.mxu0 %v221
    %299 = vmatprep.subr.mxu0 %v224
    %300 = vmatpush1.msra.mxu0 %v223
    %301 = vmatprep.subr.mxu0 %v226
    %302 = vmatpush1.msra.mxu0 %v225
    %303 = vmatprep.subr.mxu0 %v228
    %304 = vmatpush1.msra.mxu0 %v227
    %305 = vmatprep.subr.mxu0 %v230
    %306 = vmatpush1.msra.mxu0 %v229
    %307 = vmatprep.subr.mxu0 %v232
    %308 = vmatpush1.msra.mxu0 %v231
    %309 = vmatprep.subr.mxu0 %v234
    %310 = vmatpush1.msra.mxu0 %v233
    %311 = vmatprep.subr.mxu0 %v236
    %312 = vmatpush1.msra.mxu0 %v235
    %313 = vmatprep.subr.mxu0 %v238
    %314 = vmatpush1.msra.mxu0 %v237
    %315 = vmatprep.subr.mxu0 %v240
    %316 = vmatpush1.msra.mxu0 %v239
    %317 = vmatprep.subr.mxu0 %v242
    %318 = vmatpush1.msra.mxu0 %v241
    %319 = vmatprep.subr.mxu0 %v244
    %320 = vmatpush1.msra.mxu0 %v243
    %321 = vmatprep.subr.mxu0 %v246
    %322 = vmatpush1.msra.mxu0 %v245
    %323 = vmatprep.subr.mxu0 %v248
    %324 = vmatpush1.msra.mxu0 %v247
    %325 = vmatprep.subr.mxu0 %v250
    %326 = vmatpush1.msra.mxu0 %v249
    %327 = vmatprep.subr.mxu0 %v252
    %328 = vmatpush1.msra.mxu0 %v251
    %329 = vmatprep.subr.mxu0 %v254
    %330 = vmatpush1.msra.mxu0 %v253
    %331 = vmatprep.subr.mxu0 %v256
    %332 = vmatpush1.msra.mxu0 %v255
    %333 = vmatprep.subr.mxu0 %v258
    %334 = vmatpush1.msra.mxu0 %v257
    %335 = vmatprep.subr.mxu0 %v260
    %336 = vmatpush1.msra.mxu0 %v259
    %337 = vmatprep.subr.mxu0 %v262
    %338 = vmatpush1.msra.mxu0 %v261
    %339 = vmatprep.subr.mxu0 %v264
    %340 = vmatpush1.msra.mxu0 %v263
    %341 = vmatprep.subr.mxu0 %v266
    %342 = vmatpush1.msra.mxu0 %v265
    %343 = vmatprep.subr.mxu0 %v268
    %344 = vmatpush1.msra.mxu0 %v267
    %345 = vmatprep.subr.mxu0 %v270
    %346 = vmatpush1.msra.mxu0 %v269
    %347 = vmatprep.subr.mxu0 %v272
    %348 = vmatpush1.msra.mxu0 %v271
    %349 = vmatprep.subr.mxu0 %v274
    %350 = vmatpush1.msra.mxu0 %v273
    %351 = vmatprep.subr.mxu0 %v276
    %352 = vmatpush1.msra.mxu0 %v275
    %353 = vmatprep.subr.mxu0 %v278
    %354 = vmatpush1.msra.mxu0 %v277
    %355 = vmatprep.subr.mxu0 %v280
    %356 = vmatpush1.msra.mxu0 %v279
    %357 = vmatprep.mubr.f32.mxu0 %v154
    %358 = vmatmul.mubr.f32.gmra.mrb[0].mxu0 %v153
    %v359 = vpop.f32.mrb[0].mxu0
    %v360 = vadd.f32 %v286, %v359
    %v361 = vpop.f32.mrb[0].mxu0
    %v362 = vadd.f32 %v290, %v361
    %363 = vmatprep.mubr.f32.mxu0 %v156
    %364 = vmatmul.mubr.f32.gmra.mrb[0].mxu0 %v155
    %v365 = vpop.f32.mrb[0].mxu0
    %v366 = vadd.f32 %v286, %v365
    %v367 = vpop.f32.mrb[0].mxu0
    %v368 = vadd.f32 %v290, %v367
    %369 = vmatprep.mubr.f32.mxu0 %v158
    %370 = vmatmul.mubr.f32.gmra.mrb[0].mxu0 %v157
    %v371 = vpop.f32.mrb[0].mxu0
    %v372 = vadd.f32 %v286, %v371
    %v373 = vpop.f32.mrb[0].mxu0
    %v374 = vadd.f32 %v290, %v373
    %375 = vmatprep.mubr.f32.mxu0 %v160
    %376 = vmatmul.mubr.f32.gmra.mrb[0].mxu0 %v159
    %v377 = vpop.f32.mrb[0].mxu0
    %v378 = vadd.f32 %v286, %v377
    %v379 = vpop.f32.mrb[0].mxu0
    %v380 = vadd.f32 %v290, %v379
    %381 = vmatprep.mubr.f32.mxu0 %v162
    %382 = vmatmul.mubr.f32.gmra.mrb[0].mxu0 %v161
    %v383 = vpop.f32.mrb[0].mxu0
    %v384 = vadd.f32 %v286, %v383
    %v385 = vpop.f32.mrb[0].mxu0
    %v386 = vadd.f32 %v290, %v385
    %387 = vmatprep.mubr.f32.mxu0 %v164
    %388 = vmatmul.mubr.f32.gmra.mrb[0].mxu0 %v163
    %v389 = vpop.f32.mrb[0].mxu0
    %v390 = vadd.f32 %v286, %v389
    %v391 = vpop.f32.mrb[0].mxu0
    %v392 = vadd.f32 %v290, %v391
    %393 = vmatprep.mubr.f32.mxu0 %v166
    %394 = vmatmul.mubr.f32.gmra.mrb[0].mxu0 %v165
    %v395 = vpop.f32.mrb[0].mxu0
    %v396 = vadd.f32 %v286, %v395
    %v397 = vpop.f32.mrb[0].mxu0
    %v398 = vadd.f32 %v290, %v397
    %399 = vmatprep.mubr.f32.mxu0 %v168
    %400 = vmatmul.mubr.f32.gmra.mrb[0].mxu0 %v167
    %v401 = vpop.f32.mrb[0].mxu0
    %v402 = vadd.f32 %v286, %v401
    %v403 = vpop.f32.mrb[0].mxu0
    %v404 = vadd.f32 %v290, %v403
    %405 = vmatprep.mubr.f32.mxu0 %v170
    %406 = vmatmul.mubr.f32.gmra.mrb[0].mxu0 %v169
    %v407 = vpop.f32.mrb[0].mxu0
    %v408 = vadd.f32 %v286, %v407
    %v409 = vpop.f32.mrb[0].mxu0
    %v410 = vadd.f32 %v290, %v409
    %411 = vmatprep.mubr.f32.mxu0 %v172
    %412 = vmatmul.mubr.f32.gmra.mrb[0].mxu0 %v171
    %v413 = vpop.f32.mrb[0].mxu0
    %v414 = vadd.f32 %v286, %v413
    %v415 = vpop.f32.mrb[0].mxu0
    %v416 = vadd.f32 %v290, %v415
    %417 = vmatprep.mubr.f32.mxu0 %v174
    %418 = vmatmul.mubr.f32.gmra.mrb[0].mxu0 %v173
    %v419 = vpop.f32.mrb[0].mxu0
    %v420 = vadd.f32 %v286, %v419
    %v421 = vpop.f32.mrb[0].mxu0
    %v422 = vadd.f32 %v290, %v421
    %423 = vmatprep.mubr.f32.mxu0 %v176
    %424 = vmatmul.mubr.f32.gmra.mrb[0].mxu0 %v175
    %v425 = vpop.f32.mrb[0].mxu0
    %v426 = vadd.f32 %v286, %v425
    %v427 = vpop.f32.mrb[0].mxu0
    %v428 = vadd.f32 %v290, %v427
    %429 = vmatprep.mubr.f32.mxu0 %v178
    %430 = vmatmul.mubr.f32.gmra.mrb[0].mxu0 %v177
    %v431 = vpop.f32.mrb[0].mxu0
    %v432 = vadd.f32 %v286, %v431
    %v433 = vpop.f32.mrb[0].mxu0
    %v434 = vadd.f32 %v290, %v433
    %435 = vmatprep.mubr.f32.mxu0 %v180
    %436 = vmatmul.mubr.f32.gmra.mrb[0].mxu0 %v179
    %v437 = vpop.f32.mrb[0].mxu0
    %v438 = vadd.f32 %v286, %v437
    %v439 = vpop.f32.mrb[0].mxu0
    %v440 = vadd.f32 %v290, %v439
    %441 = vmatprep.mubr.f32.mxu0 %v182
    %442 = vmatmul.mubr.f32.gmra.mrb[0].mxu0 %v181
    %v443 = vpop.f32.mrb[0].mxu0
    %v444 = vadd.f32 %v286, %v443
    %v445 = vpop.f32.mrb[0].mxu0
    %v446 = vadd.f32 %v290, %v445
    %447 = vmatprep.mubr.f32.mxu0 %v184
    %448 = vmatmul.mubr.f32.gmra.mrb[0].mxu0 %v183
    %v449 = vpop.f32.mrb[0].mxu0
    %v450 = vadd.f32 %v286, %v449
    %v451 = vpop.f32.mrb[0].mxu0
    %v452 = vadd.f32 %v290, %v451
    %453 = vmatprep.mubr.f32.mxu0 %v186
    %454 = vmatmul.mubr.f32.gmra.mrb[0].mxu0 %v185
    %v455 = vpop.f32.mrb[0].mxu0
    %v456 = vadd.f32 %v286, %v455
    %v457 = vpop.f32.mrb[0].mxu0
    %v458 = vadd.f32 %v290, %v457
    %459 = vmatprep.mubr.f32.mxu0 %v188
    %460 = vmatmul.mubr.f32.gmra.mrb[0].mxu0 %v187
    %v461 = vpop.f32.mrb[0].mxu0
    %v462 = vadd.f32 %v286, %v461
    %v463 = vpop.f32.mrb[0].mxu0
    %v464 = vadd.f32 %v290, %v463
    %465 = vmatprep.mubr.f32.mxu0 %v190
    %466 = vmatmul.mubr.f32.gmra.mrb[0].mxu0 %v189
    %v467 = vpop.f32.mrb[0].mxu0
    %v468 = vadd.f32 %v286, %v467
    %v469 = vpop.f32.mrb[0].mxu0
    %v470 = vadd.f32 %v290, %v469
    %471 = vmatprep.mubr.f32.mxu0 %v192
    %472 = vmatmul.mubr.f32.gmra.mrb[0].mxu0 %v191
    %v473 = vpop.f32.mrb[0].mxu0
    %v474 = vadd.f32 %v286, %v473
    %v475 = vpop.f32.mrb[0].mxu0
    %v476 = vadd.f32 %v290, %v475
    %477 = vmatprep.mubr.f32.mxu0 %v194
    %478 = vmatmul.mubr.f32.gmra.mrb[0].mxu0 %v193
    %v479 = vpop.f32.mrb[0].mxu0
    %v480 = vadd.f32 %v286, %v479
    %v481 = vpop.f32.mrb[0].mxu0
    %v482 = vadd.f32 %v290, %v481
    %483 = vmatprep.mubr.f32.mxu0 %v196
    %484 = vmatmul.mubr.f32.gmra.mrb[0].mxu0 %v195
    %v485 = vpop.f32.mrb[0].mxu0
    %v486 = vadd.f32 %v286, %v485
    %v487 = vpop.f32.mrb[0].mxu0
    %v488 = vadd.f32 %v290, %v487
    %489 = vmatprep.mubr.f32.mxu0 %v198
    %490 = vmatmul.mubr.f32.gmra.mrb[0].mxu0 %v197
    %v491 = vpop.f32.mrb[0].mxu0
    %v492 = vadd.f32 %v286, %v491
    %v493 = vpop.f32.mrb[0].mxu0
    %v494 = vadd.f32 %v290, %v493
    %495 = vmatprep.mubr.f32.mxu0 %v200
    %496 = vmatmul.mubr.f32.gmra.mrb[0].mxu0 %v199
    %v497 = vpop.f32.mrb[0].mxu0
    %v498 = vadd.f32 %v286, %v497
    %v499 = vpop.f32.mrb[0].mxu0
    %v500 = vadd.f32 %v290, %v499
    %501 = vmatprep.mubr.f32.mxu0 %v202
    %502 = vmatmul.mubr.f32.gmra.mrb[0].mxu0 %v201
    %v503 = vpop.f32.mrb[0].mxu0
    %v504 = vadd.f32 %v286, %v503
    %v505 = vpop.f32.mrb[0].mxu0
    %v506 = vadd.f32 %v290, %v505
    %507 = vmatprep.mubr.f32.mxu0 %v204
    %508 = vmatmul.mubr.f32.gmra.mrb[0].mxu0 %v203
    %v509 = vpop.f32.mrb[0].mxu0
    %v510 = vadd.f32 %v286, %v509
    %v511 = vpop.f32.mrb[0].mxu0
    %v512 = vadd.f32 %v290, %v511
    %513 = vmatprep.mubr.f32.mxu0 %v206
    %514 = vmatmul.mubr.f32.gmra.mrb[0].mxu0 %v205
    %v515 = vpop.f32.mrb[0].mxu0
    %v516 = vadd.f32 %v286, %v515
    %v517 = vpop.f32.mrb[0].mxu0
    %v518 = vadd.f32 %v290, %v517
    %519 = vmatprep.mubr.f32.mxu0 %v208
    %520 = vmatmul.mubr.f32.gmra.mrb[0].mxu0 %v207
    %v521 = vpop.f32.mrb[0].mxu0
    %v522 = vadd.f32 %v286, %v521
    %v523 = vpop.f32.mrb[0].mxu0
    %v524 = vadd.f32 %v290, %v523
    %525 = vmatprep.mubr.f32.mxu0 %v210
    %526 = vmatmul.mubr.f32.gmra.mrb[0].mxu0 %v209
    %v527 = vpop.f32.mrb[0].mxu0
    %v528 = vadd.f32 %v286, %v527
    %v529 = vpop.f32.mrb[0].mxu0
    %v530 = vadd.f32 %v290, %v529
    %531 = vmatprep.mubr.f32.mxu0 %v212
    %532 = vmatmul.mubr.f32.gmra.mrb[0].mxu0 %v211
    %v533 = vpop.f32.mrb[0].mxu0
    %v534 = vadd.f32 %v286, %v533
    %v535 = vpop.f32.mrb[0].mxu0
    %v536 = vadd.f32 %v290, %v535
    %537 = vmatprep.mubr.f32.mxu0 %v214
    %538 = vmatmul.mubr.f32.gmra.mrb[0].mxu0 %v213
    %v539 = vpop.f32.mrb[0].mxu0
    %v540 = vadd.f32 %v286, %v539
    %v541 = vpop.f32.mrb[0].mxu0
    %v542 = vadd.f32 %v290, %v541
    %543 = vmatprep.mubr.f32.mxu0 %v216
    %544 = vmatmul.mubr.f32.gmra.mrb[0].mxu0 %v215
    %v545 = vpop.f32.mrb[0].mxu0
    %v546 = vadd.f32 %v286, %v545
    %v547 = vpop.f32.mrb[0].mxu0
    %v548 = vadd.f32 %v290, %v547
    %549 = vdwg.mxu0
    %v550 = vmul.f32 %v360, 0.088388346
    %v551 = vmul.f32 %v362, 0.088388346
    %v552 = vmul.f32 %v366, 0.088388346
    %v553 = vmul.f32 %v368, 0.088388346
    %v554 = vmul.f32 %v372, 0.088388346
    %v555 = vmul.f32 %v374, 0.088388346
    %v556 = vmul.f32 %v378, 0.088388346
    %v557 = vmul.f32 %v380, 0.088388346
    %v558 = vmul.f32 %v384, 0.088388346
    %v559 = vmul.f32 %v386, 0.088388346
    %v560 = vmul.f32 %v390, 0.088388346
    %v561 = vmul.f32 %v392, 0.088388346
    %v562 = vmul.f32 %v396, 0.088388346
    %v563 = vmul.f32 %v398, 0.088388346
    %v564 = vmul.f32 %v402, 0.088388346
    %v565 = vmul.f32 %v404, 0.088388346
    %v566 = vmul.f32 %v408, 0.088388346
    %v567 = vmul.f32 %v410, 0.088388346
    %v568 = vmul.f32 %v414, 0.088388346
    %v569 = vmul.f32 %v416, 0.088388346
    %v570 = vmul.f32 %v420, 0.088388346
    %v571 = vmul.f32 %v422, 0.088388346
    %v572 = vmul.f32 %v426, 0.088388346
    %v573 = vmul.f32 %v428, 0.088388346
    %v574 = vmul.f32 %v432, 0.088388346
    %v575 = vmul.f32 %v434, 0.088388346
    %v576 = vmul.f32 %v438, 0.088388346
    %v577 = vmul.f32 %v440, 0.088388346
    %v578 = vmul.f32 %v444, 0.088388346
    %v579 = vmul.f32 %v446, 0.088388346
    %v580 = vmul.f32 %v450, 0.088388346
    %v581 = vmul.f32 %v452, 0.088388346
    %v582 = vmul.f32 %v456, 0.088388346
    %v583 = vmul.f32 %v458, 0.088388346
    %v584 = vmul.f32 %v462, 0.088388346
    %v585 = vmul.f32 %v464, 0.088388346
    %v586 = vmul.f32 %v468, 0.088388346
    %v587 = vmul.f32 %v470, 0.088388346
    %v588 = vmul.f32 %v474, 0.088388346
    %v589 = vmul.f32 %v476, 0.088388346
    %v590 = vmul.f32 %v480, 0.088388346
    %v591 = vmul.f32 %v482, 0.088388346
    %v592 = vmul.f32 %v486, 0.088388346
    %v593 = vmul.f32 %v488, 0.088388346
    %v594 = vmul.f32 %v492, 0.088388346
    %v595 = vmul.f32 %v494, 0.088388346
    %v596 = vmul.f32 %v498, 0.088388346
    %v597 = vmul.f32 %v500, 0.088388346
    %v598 = vmul.f32 %v504, 0.088388346
    %v599 = vmul.f32 %v506, 0.088388346
    %v600 = vmul.f32 %v510, 0.088388346
    %v601 = vmul.f32 %v512, 0.088388346
    %v602 = vmul.f32 %v516, 0.088388346
    %v603 = vmul.f32 %v518, 0.088388346
    %v604 = vmul.f32 %v522, 0.088388346
    %v605 = vmul.f32 %v524, 0.088388346
    %v606 = vmul.f32 %v528, 0.088388346
    %v607 = vmul.f32 %v530, 0.088388346
    %v608 = vmul.f32 %v534, 0.088388346
    %v609 = vmul.f32 %v536, 0.088388346
    %v610 = vmul.f32 %v540, 0.088388346
    %v611 = vmul.f32 %v542, 0.088388346
    %v612 = vmul.f32 %v546, 0.088388346
    %v613 = vmul.f32 %v548, 0.088388346
    %v614 = vld [vmem:[#allocation5] sm:$0xff]
    %v615 = vld [vmem:[#allocation5 + $0x8] sm:$0xff]
    %v616 = vld [vmem:[#allocation5 + $0x10] sm:$0xff]
    %v617 = vld [vmem:[#allocation5 + $0x18] sm:$0xff]
    %v618 = vld [vmem:[#allocation5 + $0x20] sm:$0xff]
    %v619 = vld [vmem:[#allocation5 + $0x28] sm:$0xff]
    %v620 = vld [vmem:[#allocation5 + $0x30] sm:$0xff]
    %v621 = vld [vmem:[#allocation5 + $0x38] sm:$0xff]
    %v622 = vld [vmem:[#allocation5 + $0x40] sm:$0xff]
    %v623 = vld [vmem:[#allocation5 + $0x48] sm:$0xff]
    %v624 = vld [vmem:[#allocation5 + $0x50] sm:$0xff]
    %v625 = vld [vmem:[#allocation5 + $0x58] sm:$0xff]
    %v626 = vld [vmem:[#allocation5 + $0x60] sm:$0xff]
    %v627 = vld [vmem:[#allocation5 + $0x68] sm:$0xff]
    %v628 = vld [vmem:[#allocation5 + $0x70] sm:$0xff]
    %v629 = vld [vmem:[#allocation5 + $0x78] sm:$0xff]
    %v630 = vld [vmem:[#allocation5 + $0x80] sm:$0xff]
    %v631 = vld [vmem:[#allocation5 + $0x88] sm:$0xff]
    %v632 = vld [vmem:[#allocation5 + $0x90] sm:$0xff]
    %v633 = vld [vmem:[#allocation5 + $0x98] sm:$0xff]
    %v634 = vld [vmem:[#allocation5 + $0xa0] sm:$0xff]
    %v635 = vld [vmem:[#allocation5 + $0xa8] sm:$0xff]
    %v636 = vld [vmem:[#allocation5 + $0xb0] sm:$0xff]
    %v637 = vld [vmem:[#allocation5 + $0xb8] sm:$0xff]
    %v638 = vld [vmem:[#allocation5 + $0xc0] sm:$0xff]
    %v639 = vld [vmem:[#allocation5 + $0xc8] sm:$0xff]
    %v640 = vld [vmem:[#allocation5 + $0xd0] sm:$0xff]
    %v641 = vld [vmem:[#allocation5 + $0xd8] sm:$0xff]
    %v642 = vld [vmem:[#allocation5 + $0xe0] sm:$0xff]
    %v643 = vld [vmem:[#allocation5 + $0xe8] sm:$0xff]
    %v644 = vld [vmem:[#allocation5 + $0xf0] sm:$0xff]
    %v645 = vld [vmem:[#allocation5 + $0xf8] sm:$0xff]
    %v646 = vld [vmem:[#allocation5 + $0x100] sm:$0xff]
    %v647 = vld [vmem:[#allocation5 + $0x108] sm:$0xff]
    %v648 = vld [vmem:[#allocation5 + $0x110] sm:$0xff]
    %v649 = vld [vmem:[#allocation5 + $0x118] sm:$0xff]
    %v650 = vld [vmem:[#allocation5 + $0x120] sm:$0xff]
    %v651 = vld [vmem:[#allocation5 + $0x128] sm:$0xff]
    %v652 = vld [vmem:[#allocation5 + $0x130] sm:$0xff]
    %v653 = vld [vmem:[#allocation5 + $0x138] sm:$0xff]
    %v654 = vld [vmem:[#allocation5 + $0x140] sm:$0xff]
    %v655 = vld [vmem:[#allocation5 + $0x148] sm:$0xff]
    %v656 = vld [vmem:[#allocation5 + $0x150] sm:$0xff]
    %v657 = vld [vmem:[#allocation5 + $0x158] sm:$0xff]
    %v658 = vld [vmem:[#allocation5 + $0x160] sm:$0xff]
    %v659 = vld [vmem:[#allocation5 + $0x168] sm:$0xff]
    %v660 = vld [vmem:[#allocation5 + $0x170] sm:$0xff]
    %v661 = vld [vmem:[#allocation5 + $0x178] sm:$0xff]
    %v662 = vld [vmem:[#allocation5 + $0x180] sm:$0xff]
    %v663 = vld [vmem:[#allocation5 + $0x188] sm:$0xff]
    %v664 = vld [vmem:[#allocation5 + $0x190] sm:$0xff]
    %v665 = vld [vmem:[#allocation5 + $0x198] sm:$0xff]
    %v666 = vld [vmem:[#allocation5 + $0x1a0] sm:$0xff]
    %v667 = vld [vmem:[#allocation5 + $0x1a8] sm:$0xff]
    %v668 = vld [vmem:[#allocation5 + $0x1b0] sm:$0xff]
    %v669 = vld [vmem:[#allocation5 + $0x1b8] sm:$0xff]
    %v670 = vld [vmem:[#allocation5 + $0x1c0] sm:$0xff]
    %v671 = vld [vmem:[#allocation5 + $0x1c8] sm:$0xff]
    %v672 = vld [vmem:[#allocation5 + $0x1d0] sm:$0xff]
    %v673 = vld [vmem:[#allocation5 + $0x1d8] sm:$0xff]
    %v674 = vld [vmem:[#allocation5 + $0x1e0] sm:$0xff]
    %v675 = vld [vmem:[#allocation5 + $0x1e8] sm:$0xff]
    %v676 = vld [vmem:[#allocation5 + $0x1f0] sm:$0xff]
    %v677 = vld [vmem:[#allocation5 + $0x1f8] sm:$0xff]
    %v678 = vld [vmem:[#allocation11] sm:$0xff]
    %v679 = vld [vmem:[#allocation11 + $0x8] sm:$0xff]
    %v680 = vld [vmem:[#allocation11 + $0x10] sm:$0xff]
    %v681 = vld [vmem:[#allocation11 + $0x18] sm:$0xff]
    %v682 = vld [vmem:[#allocation11 + $0x20] sm:$0xff]
    %v683 = vld [vmem:[#allocation11 + $0x28] sm:$0xff]
    %v684 = vld [vmem:[#allocation11 + $0x30] sm:$0xff]
    %v685 = vld [vmem:[#allocation11 + $0x38] sm:$0xff]
    %v686 = vld [vmem:[#allocation11 + $0x40] sm:$0xff]
    %v687 = vld [vmem:[#allocation11 + $0x48] sm:$0xff]
    %v688 = vld [vmem:[#allocation11 + $0x50] sm:$0xff]
    %v689 = vld [vmem:[#allocation11 + $0x58] sm:$0xff]
    %v690 = vld [vmem:[#allocation11 + $0x60] sm:$0xff]
    %v691 = vld [vmem:[#allocation11 + $0x68] sm:$0xff]
    %v692 = vld [vmem:[#allocation11 + $0x70] sm:$0xff]
    %v693 = vld [vmem:[#allocation11 + $0x78] sm:$0xff]
    %v694 = vld [vmem:[#allocation11 + $0x80] sm:$0xff]
    %v695 = vld [vmem:[#allocation11 + $0x88] sm:$0xff]
    %v696 = vld [vmem:[#allocation11 + $0x90] sm:$0xff]
    %v697 = vld [vmem:[#allocation11 + $0x98] sm:$0xff]
    %v698 = vld [vmem:[#allocation11 + $0xa0] sm:$0xff]
    %v699 = vld [vmem:[#allocation11 + $0xa8] sm:$0xff]
    %v700 = vld [vmem:[#allocation11 + $0xb0] sm:$0xff]
    %v701 = vld [vmem:[#allocation11 + $0xb8] sm:$0xff]
    %v702 = vld [vmem:[#allocation11 + $0xc0] sm:$0xff]
    %v703 = vld [vmem:[#allocation11 + $0xc8] sm:$0xff]
    %v704 = vld [vmem:[#allocation11 + $0xd0] sm:$0xff]
    %v705 = vld [vmem:[#allocation11 + $0xd8] sm:$0xff]
    %v706 = vld [vmem:[#allocation11 + $0xe0] sm:$0xff]
    %v707 = vld [vmem:[#allocation11 + $0xe8] sm:$0xff]
    %v708 = vld [vmem:[#allocation11 + $0xf0] sm:$0xff]
    %v709 = vld [vmem:[#allocation11 + $0xf8] sm:$0xff]
    %v710 = vld [vmem:[#allocation11 + $0x100] sm:$0xff]
    %v711 = vld [vmem:[#allocation11 + $0x108] sm:$0xff]
    %v712 = vld [vmem:[#allocation11 + $0x110] sm:$0xff]
    %v713 = vld [vmem:[#allocation11 + $0x118] sm:$0xff]
    %v714 = vld [vmem:[#allocation11 + $0x120] sm:$0xff]
    %v715 = vld [vmem:[#allocation11 + $0x128] sm:$0xff]
    %v716 = vld [vmem:[#allocation11 + $0x130] sm:$0xff]
    %v717 = vld [vmem:[#allocation11 + $0x138] sm:$0xff]
    %v718 = vld [vmem:[#allocation11 + $0x140] sm:$0xff]
    %v719 = vld [vmem:[#allocation11 + $0x148] sm:$0xff]
    %v720 = vld [vmem:[#allocation11 + $0x150] sm:$0xff]
    %v721 = vld [vmem:[#allocation11 + $0x158] sm:$0xff]
    %v722 = vld [vmem:[#allocation11 + $0x160] sm:$0xff]
    %v723 = vld [vmem:[#allocation11 + $0x168] sm:$0xff]
    %v724 = vld [vmem:[#allocation11 + $0x170] sm:$0xff]
    %v725 = vld [vmem:[#allocation11 + $0x178] sm:$0xff]
    %v726 = vld [vmem:[#allocation11 + $0x180] sm:$0xff]
    %v727 = vld [vmem:[#allocation11 + $0x188] sm:$0xff]
    %v728 = vld [vmem:[#allocation11 + $0x190] sm:$0xff]
    %v729 = vld [vmem:[#allocation11 + $0x198] sm:$0xff]
    %v730 = vld [vmem:[#allocation11 + $0x1a0] sm:$0xff]
    %v731 = vld [vmem:[#allocation11 + $0x1a8] sm:$0xff]
    %v732 = vld [vmem:[#allocation11 + $0x1b0] sm:$0xff]
    %v733 = vld [vmem:[#allocation11 + $0x1b8] sm:$0xff]
    %v734 = vld [vmem:[#allocation11 + $0x1c0] sm:$0xff]
    %v735 = vld [vmem:[#allocation11 + $0x1c8] sm:$0xff]
    %v736 = vld [vmem:[#allocation11 + $0x1d0] sm:$0xff]
    %v737 = vld [vmem:[#allocation11 + $0x1d8] sm:$0xff]
    %v738 = vld [vmem:[#allocation11 + $0x1e0] sm:$0xff]
    %v739 = vld [vmem:[#allocation11 + $0x1e8] sm:$0xff]
    %v740 = vld [vmem:[#allocation11 + $0x1f0] sm:$0xff]
    %v741 = vld [vmem:[#allocation11 + $0x1f8] sm:$0xff]
    %v742 = vld [vmem:[#allocation13] sm:$0x3]
    %v744 = vlaneseq
    %v745 = vshrl.u32 %v744, 7
    %v746 = vsub.s32 0, %v745
    %v747 = vrot.slane %v742, %v746
    %v748 = vlaneseq
    %v749 = vshrl.u32 %v748, 7
    %v750 = vsub.s32 1, %v749
    %v751 = vrot.slane %v742, %v750
    %754 = vmatprep.subr.mxu0 %v679
    %755 = vmatpush1.msra.mxu0 %v678
    %756 = vmatprep.subr.mxu0 %v681
    %757 = vmatpush1.msra.mxu0 %v680
    %758 = vmatprep.subr.mxu0 %v683
    %759 = vmatpush1.msra.mxu0 %v682
    %760 = vmatprep.subr.mxu0 %v685
    %761 = vmatpush1.msra.mxu0 %v684
    %762 = vmatprep.subr.mxu0 %v687
    %763 = vmatpush1.msra.mxu0 %v686
    %764 = vmatprep.subr.mxu0 %v689
    %765 = vmatpush1.msra.mxu0 %v688
    %766 = vmatprep.subr.mxu0 %v691
    %767 = vmatpush1.msra.mxu0 %v690
    %768 = vmatprep.subr.mxu0 %v693
    %769 = vmatpush1.msra.mxu0 %v692
    %770 = vmatprep.subr.mxu0 %v695
    %771 = vmatpush1.msra.mxu0 %v694
    %772 = vmatprep.subr.mxu0 %v697
    %773 = vmatpush1.msra.mxu0 %v696
    %774 = vmatprep.subr.mxu0 %v699
    %775 = vmatpush1.msra.mxu0 %v698
    %776 = vmatprep.subr.mxu0 %v701
    %777 = vmatpush1.msra.mxu0 %v700
    %778 = vmatprep.subr.mxu0 %v703
    %779 = vmatpush1.msra.mxu0 %v702
    %780 = vmatprep.subr.mxu0 %v705
    %781 = vmatpush1.msra.mxu0 %v704
    %782 = vmatprep.subr.mxu0 %v707
    %783 = vmatpush1.msra.mxu0 %v706
    %784 = vmatprep.subr.mxu0 %v709
    %785 = vmatpush1.msra.mxu0 %v708
    %786 = vmatprep.subr.mxu0 %v711
    %787 = vmatpush1.msra.mxu0 %v710
    %788 = vmatprep.subr.mxu0 %v713
    %789 = vmatpush1.msra.mxu0 %v712
    %790 = vmatprep.subr.mxu0 %v715
    %791 = vmatpush1.msra.mxu0 %v714
    %792 = vmatprep.subr.mxu0 %v717
    %793 = vmatpush1.msra.mxu0 %v716
    %794 = vmatprep.subr.mxu0 %v719
    %795 = vmatpush1.msra.mxu0 %v718
    %796 = vmatprep.subr.mxu0 %v721
    %797 = vmatpush1.msra.mxu0 %v720
    %798 = vmatprep.subr.mxu0 %v723
    %799 = vmatpush1.msra.mxu0 %v722
    %800 = vmatprep.subr.mxu0 %v725
    %801 = vmatpush1.msra.mxu0 %v724
    %802 = vmatprep.subr.mxu0 %v727
    %803 = vmatpush1.msra.mxu0 %v726
    %804 = vmatprep.subr.mxu0 %v729
    %805 = vmatpush1.msra.mxu0 %v728
    %806 = vmatprep.subr.mxu0 %v731
    %807 = vmatpush1.msra.mxu0 %v730
    %808 = vmatprep.subr.mxu0 %v733
    %809 = vmatpush1.msra.mxu0 %v732
    %810 = vmatprep.subr.mxu0 %v735
    %811 = vmatpush1.msra.mxu0 %v734
    %812 = vmatprep.subr.mxu0 %v737
    %813 = vmatpush1.msra.mxu0 %v736
    %814 = vmatprep.subr.mxu0 %v739
    %815 = vmatpush1.msra.mxu0 %v738
    %816 = vmatprep.subr.mxu0 %v741
    %817 = vmatpush1.msra.mxu0 %v740
    %818 = vmatprep.mubr.f32.mxu0 %v615
    %819 = vmatmul.mubr.f32.gmra.mrb[0].mxu0 %v614
    %v820 = vpop.f32.mrb[0].mxu0
    %v821 = vadd.f32 %v747, %v820
    %v822 = vpop.f32.mrb[0].mxu0
    %v823 = vadd.f32 %v751, %v822
    %824 = vmatprep.mubr.f32.mxu0 %v617
    %825 = vmatmul.mubr.f32.gmra.mrb[0].mxu0 %v616
    %v826 = vpop.f32.mrb[0].mxu0
    %v827 = vadd.f32 %v747, %v826
    %v828 = vpop.f32.mrb[0].mxu0
    %v829 = vadd.f32 %v751, %v828
    %830 = vmatprep.mubr.f32.mxu0 %v619
    %831 = vmatmul.mubr.f32.gmra.mrb[0].mxu0 %v618
    %v832 = vpop.f32.mrb[0].mxu0
    %v833 = vadd.f32 %v747, %v832
    %v834 = vpop.f32.mrb[0].mxu0
    %v835 = vadd.f32 %v751, %v834
    %836 = vmatprep.mubr.f32.mxu0 %v621
    %837 = vmatmul.mubr.f32.gmra.mrb[0].mxu0 %v620
    %v838 = vpop.f32.mrb[0].mxu0
    %v839 = vadd.f32 %v747, %v838
    %v840 = vpop.f32.mrb[0].mxu0
    %v841 = vadd.f32 %v751, %v840
    %842 = vmatprep.mubr.f32.mxu0 %v623
    %843 = vmatmul.mubr.f32.gmra.mrb[0].mxu0 %v622
    %v844 = vpop.f32.mrb[0].mxu0
    %v845 = vadd.f32 %v747, %v844
    %v846 = vpop.f32.mrb[0].mxu0
    %v847 = vadd.f32 %v751, %v846
    %848 = vmatprep.mubr.f32.mxu0 %v625
    %849 = vmatmul.mubr.f32.gmra.mrb[0].mxu0 %v624
    %v850 = vpop.f32.mrb[0].mxu0
    %v851 = vadd.f32 %v747, %v850
    %v852 = vpop.f32.mrb[0].mxu0
    %v853 = vadd.f32 %v751, %v852
    %854 = vmatprep.mubr.f32.mxu0 %v627
    %855 = vmatmul.mubr.f32.gmra.mrb[0].mxu0 %v626
    %v856 = vpop.f32.mrb[0].mxu0
    %v857 = vadd.f32 %v747, %v856
    %v858 = vpop.f32.mrb[0].mxu0
    %v859 = vadd.f32 %v751, %v858
    %860 = vmatprep.mubr.f32.mxu0 %v629
    %861 = vmatmul.mubr.f32.gmra.mrb[0].mxu0 %v628
    %v862 = vpop.f32.mrb[0].mxu0
    %v863 = vadd.f32 %v747, %v862
    %v864 = vpop.f32.mrb[0].mxu0
    %v865 = vadd.f32 %v751, %v864
    %866 = vmatprep.mubr.f32.mxu0 %v631
    %867 = vmatmul.mubr.f32.gmra.mrb[0].mxu0 %v630
    %v868 = vpop.f32.mrb[0].mxu0
    %v869 = vadd.f32 %v747, %v868
    %v870 = vpop.f32.mrb[0].mxu0
    %v871 = vadd.f32 %v751, %v870
    %872 = vmatprep.mubr.f32.mxu0 %v633
    %873 = vmatmul.mubr.f32.gmra.mrb[0].mxu0 %v632
    %v874 = vpop.f32.mrb[0].mxu0
    %v875 = vadd.f32 %v747, %v874
    %v876 = vpop.f32.mrb[0].mxu0
    %v877 = vadd.f32 %v751, %v876
    %878 = vmatprep.mubr.f32.mxu0 %v635
    %879 = vmatmul.mubr.f32.gmra.mrb[0].mxu0 %v634
    %v880 = vpop.f32.mrb[0].mxu0
    %v881 = vadd.f32 %v747, %v880
    %v882 = vpop.f32.mrb[0].mxu0
    %v883 = vadd.f32 %v751, %v882
    %884 = vmatprep.mubr.f32.mxu0 %v637
    %885 = vmatmul.mubr.f32.gmra.mrb[0].mxu0 %v636
    %v886 = vpop.f32.mrb[0].mxu0
    %v887 = vadd.f32 %v747, %v886
    %v888 = vpop.f32.mrb[0].mxu0
    %v889 = vadd.f32 %v751, %v888
    %890 = vmatprep.mubr.f32.mxu0 %v639
    %891 = vmatmul.mubr.f32.gmra.mrb[0].mxu0 %v638
    %v892 = vpop.f32.mrb[0].mxu0
    %v893 = vadd.f32 %v747, %v892
    %v894 = vpop.f32.mrb[0].mxu0
    %v895 = vadd.f32 %v751, %v894
    %896 = vmatprep.mubr.f32.mxu0 %v641
    %897 = vmatmul.mubr.f32.gmra.mrb[0].mxu0 %v640
    %v898 = vpop.f32.mrb[0].mxu0
    %v899 = vadd.f32 %v747, %v898
    %v900 = vpop.f32.mrb[0].mxu0
    %v901 = vadd.f32 %v751, %v900
    %902 = vmatprep.mubr.f32.mxu0 %v643
    %903 = vmatmul.mubr.f32.gmra.mrb[0].mxu0 %v642
    %v904 = vpop.f32.mrb[0].mxu0
    %v905 = vadd.f32 %v747, %v904
    %v906 = vpop.f32.mrb[0].mxu0
    %v907 = vadd.f32 %v751, %v906
    %908 = vmatprep.mubr.f32.mxu0 %v645
    %909 = vmatmul.mubr.f32.gmra.mrb[0].mxu0 %v644
    %v910 = vpop.f32.mrb[0].mxu0
    %v911 = vadd.f32 %v747, %v910
    %v912 = vpop.f32.mrb[0].mxu0
    %v913 = vadd.f32 %v751, %v912
    %914 = vmatprep.mubr.f32.mxu0 %v647
    %915 = vmatmul.mubr.f32.gmra.mrb[0].mxu0 %v646
    %v916 = vpop.f32.mrb[0].mxu0
    %v917 = vadd.f32 %v747, %v916
    %v918 = vpop.f32.mrb[0].mxu0
    %v919 = vadd.f32 %v751, %v918
    %920 = vmatprep.mubr.f32.mxu0 %v649
    %921 = vmatmul.mubr.f32.gmra.mrb[0].mxu0 %v648
    %v922 = vpop.f32.mrb[0].mxu0
    %v923 = vadd.f32 %v747, %v922
    %v924 = vpop.f32.mrb[0].mxu0
    %v925 = vadd.f32 %v751, %v924
    %926 = vmatprep.mubr.f32.mxu0 %v651
    %927 = vmatmul.mubr.f32.gmra.mrb[0].mxu0 %v650
    %v928 = vpop.f32.mrb[0].mxu0
    %v929 = vadd.f32 %v747, %v928
    %v930 = vpop.f32.mrb[0].mxu0
    %v931 = vadd.f32 %v751, %v930
    %932 = vmatprep.mubr.f32.mxu0 %v653
    %933 = vmatmul.mubr.f32.gmra.mrb[0].mxu0 %v652
    %v934 = vpop.f32.mrb[0].mxu0
    %v935 = vadd.f32 %v747, %v934
    %v936 = vpop.f32.mrb[0].mxu0
    %v937 = vadd.f32 %v751, %v936
    %938 = vmatprep.mubr.f32.mxu0 %v655
    %939 = vmatmul.mubr.f32.gmra.mrb[0].mxu0 %v654
    %v940 = vpop.f32.mrb[0].mxu0
    %v941 = vadd.f32 %v747, %v940
    %v942 = vpop.f32.mrb[0].mxu0
    %v943 = vadd.f32 %v751, %v942
    %944 = vmatprep.mubr.f32.mxu0 %v657
    %945 = vmatmul.mubr.f32.gmra.mrb[0].mxu0 %v656
    %v946 = vpop.f32.mrb[0].mxu0
    %v947 = vadd.f32 %v747, %v946
    %v948 = vpop.f32.mrb[0].mxu0
    %v949 = vadd.f32 %v751, %v948
    %950 = vmatprep.mubr.f32.mxu0 %v659
    %951 = vmatmul.mubr.f32.gmra.mrb[0].mxu0 %v658
    %v952 = vpop.f32.mrb[0].mxu0
    %v953 = vadd.f32 %v747, %v952
    %v954 = vpop.f32.mrb[0].mxu0
    %v955 = vadd.f32 %v751, %v954
    %956 = vmatprep.mubr.f32.mxu0 %v661
    %957 = vmatmul.mubr.f32.gmra.mrb[0].mxu0 %v660
    %v958 = vpop.f32.mrb[0].mxu0
    %v959 = vadd.f32 %v747, %v958
    %v960 = vpop.f32.mrb[0].mxu0
    %v961 = vadd.f32 %v751, %v960
    %962 = vmatprep.mubr.f32.mxu0 %v663
    %963 = vmatmul.mubr.f32.gmra.mrb[0].mxu0 %v662
    %v964 = vpop.f32.mrb[0].mxu0
    %v965 = vadd.f32 %v747, %v964
    %v966 = vpop.f32.mrb[0].mxu0
    %v967 = vadd.f32 %v751, %v966
    %968 = vmatprep.mubr.f32.mxu0 %v665
    %969 = vmatmul.mubr.f32.gmra.mrb[0].mxu0 %v664
    %v970 = vpop.f32.mrb[0].mxu0
    %v971 = vadd.f32 %v747, %v970
    %v972 = vpop.f32.mrb[0].mxu0
    %v973 = vadd.f32 %v751, %v972
    %974 = vmatprep.mubr.f32.mxu0 %v667
    %975 = vmatmul.mubr.f32.gmra.mrb[0].mxu0 %v666
    %v976 = vpop.f32.mrb[0].mxu0
    %v977 = vadd.f32 %v747, %v976
    %v978 = vpop.f32.mrb[0].mxu0
    %v979 = vadd.f32 %v751, %v978
    %980 = vmatprep.mubr.f32.mxu0 %v669
    %981 = vmatmul.mubr.f32.gmra.mrb[0].mxu0 %v668
    %v982 = vpop.f32.mrb[0].mxu0
    %v983 = vadd.f32 %v747, %v982
    %v984 = vpop.f32.mrb[0].mxu0
    %v985 = vadd.f32 %v751, %v984
    %986 = vmatprep.mubr.f32.mxu0 %v671
    %987 = vmatmul.mubr.f32.gmra.mrb[0].mxu0 %v670
    %v988 = vpop.f32.mrb[0].mxu0
    %v989 = vadd.f32 %v747, %v988
    %v990 = vpop.f32.mrb[0].mxu0
    %v991 = vadd.f32 %v751, %v990
    %992 = vmatprep.mubr.f32.mxu0 %v673
    %993 = vmatmul.mubr.f32.gmra.mrb[0].mxu0 %v672
    %v994 = vpop.f32.mrb[0].mxu0
    %v995 = vadd.f32 %v747, %v994
    %v996 = vpop.f32.mrb[0].mxu0
    %v997 = vadd.f32 %v751, %v996
    %998 = vmatprep.mubr.f32.mxu0 %v675
    %999 = vmatmul.mubr.f32.gmra.mrb[0].mxu0 %v674
    %v1000 = vpop.f32.mrb[0].mxu0
    %v1001 = vadd.f32 %v747, %v1000
    %v1002 = vpop.f32.mrb[0].mxu0
    %v1003 = vadd.f32 %v751, %v1002
    %1004 = vmatprep.mubr.f32.mxu0 %v677
    %1005 = vmatmul.mubr.f32.gmra.mrb[0].mxu0 %v676
    %v1006 = vpop.f32.mrb[0].mxu0
    %v1007 = vadd.f32 %v747, %v1006
    %v1008 = vpop.f32.mrb[0].mxu0
    %v1009 = vadd.f32 %v751, %v1008
    %1010 = vdwg.mxu0
    %v1011 = vld [vmem:[#allocation7] sm:$0xff]
    %v1012 = vld [vmem:[#allocation7 + $0x8] sm:$0xff]
    %v1013 = vld [vmem:[#allocation7 + $0x10] sm:$0xff]
    %v1014 = vld [vmem:[#allocation7 + $0x18] sm:$0xff]
    %v1015 = vld [vmem:[#allocation7 + $0x20] sm:$0xff]
    %v1016 = vld [vmem:[#allocation7 + $0x28] sm:$0xff]
    %v1017 = vld [vmem:[#allocation7 + $0x30] sm:$0xff]
    %v1018 = vld [vmem:[#allocation7 + $0x38] sm:$0xff]
    %v1019 = vld [vmem:[#allocation7 + $0x40] sm:$0xff]
    %v1020 = vld [vmem:[#allocation7 + $0x48] sm:$0xff]
    %v1021 = vld [vmem:[#allocation7 + $0x50] sm:$0xff]
    %v1022 = vld [vmem:[#allocation7 + $0x58] sm:$0xff]
    %v1023 = vld [vmem:[#allocation7 + $0x60] sm:$0xff]
    %v1024 = vld [vmem:[#allocation7 + $0x68] sm:$0xff]
    %v1025 = vld [vmem:[#allocation7 + $0x70] sm:$0xff]
    %v1026 = vld [vmem:[#allocation7 + $0x78] sm:$0xff]
    %v1027 = vld [vmem:[#allocation7 + $0x80] sm:$0xff]
    %v1028 = vld [vmem:[#allocation7 + $0x88] sm:$0xff]
    %v1029 = vld [vmem:[#allocation7 + $0x90] sm:$0xff]
    %v1030 = vld [vmem:[#allocation7 + $0x98] sm:$0xff]
    %v1031 = vld [vmem:[#allocation7 + $0xa0] sm:$0xff]
    %v1032 = vld [vmem:[#allocation7 + $0xa8] sm:$0xff]
    %v1033 = vld [vmem:[#allocation7 + $0xb0] sm:$0xff]
    %v1034 = vld [vmem:[#allocation7 + $0xb8] sm:$0xff]
    %v1035 = vld [vmem:[#allocation7 + $0xc0] sm:$0xff]
    %v1036 = vld [vmem:[#allocation7 + $0xc8] sm:$0xff]
    %v1037 = vld [vmem:[#allocation7 + $0xd0] sm:$0xff]
    %v1038 = vld [vmem:[#allocation7 + $0xd8] sm:$0xff]
    %v1039 = vld [vmem:[#allocation7 + $0xe0] sm:$0xff]
    %v1040 = vld [vmem:[#allocation7 + $0xe8] sm:$0xff]
    %v1041 = vld [vmem:[#allocation7 + $0xf0] sm:$0xff]
    %v1042 = vld [vmem:[#allocation7 + $0xf8] sm:$0xff]
    %v1043 = vld [vmem:[#allocation7 + $0x100] sm:$0xff]
    %v1044 = vld [vmem:[#allocation7 + $0x108] sm:$0xff]
    %v1045 = vld [vmem:[#allocation7 + $0x110] sm:$0xff]
    %v1046 = vld [vmem:[#allocation7 + $0x118] sm:$0xff]
    %v1047 = vld [vmem:[#allocation7 + $0x120] sm:$0xff]
    %v1048 = vld [vmem:[#allocation7 + $0x128] sm:$0xff]
    %v1049 = vld [vmem:[#allocation7 + $0x130] sm:$0xff]
    %v1050 = vld [vmem:[#allocation7 + $0x138] sm:$0xff]
    %v1051 = vld [vmem:[#allocation7 + $0x140] sm:$0xff]
    %v1052 = vld [vmem:[#allocation7 + $0x148] sm:$0xff]
    %v1053 = vld [vmem:[#allocation7 + $0x150] sm:$0xff]
    %v1054 = vld [vmem:[#allocation7 + $0x158] sm:$0xff]
    %v1055 = vld [vmem:[#allocation7 + $0x160] sm:$0xff]
    %v1056 = vld [vmem:[#allocation7 + $0x168] sm:$0xff]
    %v1057 = vld [vmem:[#allocation7 + $0x170] sm:$0xff]
    %v1058 = vld [vmem:[#allocation7 + $0x178] sm:$0xff]
    %v1059 = vld [vmem:[#allocation7 + $0x180] sm:$0xff]
    %v1060 = vld [vmem:[#allocation7 + $0x188] sm:$0xff]
    %v1061 = vld [vmem:[#allocation7 + $0x190] sm:$0xff]
    %v1062 = vld [vmem:[#allocation7 + $0x198] sm:$0xff]
    %v1063 = vld [vmem:[#allocation7 + $0x1a0] sm:$0xff]
    %v1064 = vld [vmem:[#allocation7 + $0x1a8] sm:$0xff]
    %v1065 = vld [vmem:[#allocation7 + $0x1b0] sm:$0xff]
    %v1066 = vld [vmem:[#allocation7 + $0x1b8] sm:$0xff]
    %v1067 = vld [vmem:[#allocation7 + $0x1c0] sm:$0xff]
    %v1068 = vld [vmem:[#allocation7 + $0x1c8] sm:$0xff]
    %v1069 = vld [vmem:[#allocation7 + $0x1d0] sm:$0xff]
    %v1070 = vld [vmem:[#allocation7 + $0x1d8] sm:$0xff]
    %v1071 = vld [vmem:[#allocation7 + $0x1e0] sm:$0xff]
    %v1072 = vld [vmem:[#allocation7 + $0x1e8] sm:$0xff]
    %v1073 = vld [vmem:[#allocation7 + $0x1f0] sm:$0xff]
    %v1074 = vld [vmem:[#allocation7 + $0x1f8] sm:$0xff]
    %v1075 = vld [vmem:[#allocation14] sm:$0xff]
    %v1076 = vld [vmem:[#allocation14 + $0x8] sm:$0xff]
    %v1077 = vld [vmem:[#allocation14 + $0x10] sm:$0xff]
    %v1078 = vld [vmem:[#allocation14 + $0x18] sm:$0xff]
    %v1079 = vld [vmem:[#allocation14 + $0x20] sm:$0xff]
    %v1080 = vld [vmem:[#allocation14 + $0x28] sm:$0xff]
    %v1081 = vld [vmem:[#allocation14 + $0x30] sm:$0xff]
    %v1082 = vld [vmem:[#allocation14 + $0x38] sm:$0xff]
    %v1083 = vld [vmem:[#allocation14 + $0x40] sm:$0xff]
    %v1084 = vld [vmem:[#allocation14 + $0x48] sm:$0xff]
    %v1085 = vld [vmem:[#allocation14 + $0x50] sm:$0xff]
    %v1086 = vld [vmem:[#allocation14 + $0x58] sm:$0xff]
    %v1087 = vld [vmem:[#allocation14 + $0x60] sm:$0xff]
    %v1088 = vld [vmem:[#allocation14 + $0x68] sm:$0xff]
    %v1089 = vld [vmem:[#allocation14 + $0x70] sm:$0xff]
    %v1090 = vld [vmem:[#allocation14 + $0x78] sm:$0xff]
    %v1091 = vld [vmem:[#allocation14 + $0x80] sm:$0xff]
    %v1092 = vld [vmem:[#allocation14 + $0x88] sm:$0xff]
    %v1093 = vld [vmem:[#allocation14 + $0x90] sm:$0xff]
    %v1094 = vld [vmem:[#allocation14 + $0x98] sm:$0xff]
    %v1095 = vld [vmem:[#allocation14 + $0xa0] sm:$0xff]
    %v1096 = vld [vmem:[#allocation14 + $0xa8] sm:$0xff]
    %v1097 = vld [vmem:[#allocation14 + $0xb0] sm:$0xff]
    %v1098 = vld [vmem:[#allocation14 + $0xb8] sm:$0xff]
    %v1099 = vld [vmem:[#allocation14 + $0xc0] sm:$0xff]
    %v1100 = vld [vmem:[#allocation14 + $0xc8] sm:$0xff]
    %v1101 = vld [vmem:[#allocation14 + $0xd0] sm:$0xff]
    %v1102 = vld [vmem:[#allocation14 + $0xd8] sm:$0xff]
    %v1103 = vld [vmem:[#allocation14 + $0xe0] sm:$0xff]
    %v1104 = vld [vmem:[#allocation14 + $0xe8] sm:$0xff]
    %v1105 = vld [vmem:[#allocation14 + $0xf0] sm:$0xff]
    %v1106 = vld [vmem:[#allocation14 + $0xf8] sm:$0xff]
    %v1107 = vld [vmem:[#allocation14 + $0x100] sm:$0xff]
    %v1108 = vld [vmem:[#allocation14 + $0x108] sm:$0xff]
    %v1109 = vld [vmem:[#allocation14 + $0x110] sm:$0xff]
    %v1110 = vld [vmem:[#allocation14 + $0x118] sm:$0xff]
    %v1111 = vld [vmem:[#allocation14 + $0x120] sm:$0xff]
    %v1112 = vld [vmem:[#allocation14 + $0x128] sm:$0xff]
    %v1113 = vld [vmem:[#allocation14 + $0x130] sm:$0xff]
    %v1114 = vld [vmem:[#allocation14 + $0x138] sm:$0xff]
    %v1115 = vld [vmem:[#allocation14 + $0x140] sm:$0xff]
    %v1116 = vld [vmem:[#allocation14 + $0x148] sm:$0xff]
    %v1117 = vld [vmem:[#allocation14 + $0x150] sm:$0xff]
    %v1118 = vld [vmem:[#allocation14 + $0x158] sm:$0xff]
    %v1119 = vld [vmem:[#allocation14 + $0x160] sm:$0xff]
    %v1120 = vld [vmem:[#allocation14 + $0x168] sm:$0xff]
    %v1121 = vld [vmem:[#allocation14 + $0x170] sm:$0xff]
    %v1122 = vld [vmem:[#allocation14 + $0x178] sm:$0xff]
    %v1123 = vld [vmem:[#allocation14 + $0x180] sm:$0xff]
    %v1124 = vld [vmem:[#allocation14 + $0x188] sm:$0xff]
    %v1125 = vld [vmem:[#allocation14 + $0x190] sm:$0xff]
    %v1126 = vld [vmem:[#allocation14 + $0x198] sm:$0xff]
    %v1127 = vld [vmem:[#allocation14 + $0x1a0] sm:$0xff]
    %v1128 = vld [vmem:[#allocation14 + $0x1a8] sm:$0xff]
    %v1129 = vld [vmem:[#allocation14 + $0x1b0] sm:$0xff]
    %v1130 = vld [vmem:[#allocation14 + $0x1b8] sm:$0xff]
    %v1131 = vld [vmem:[#allocation14 + $0x1c0] sm:$0xff]
    %v1132 = vld [vmem:[#allocation14 + $0x1c8] sm:$0xff]
    %v1133 = vld [vmem:[#allocation14 + $0x1d0] sm:$0xff]
    %v1134 = vld [vmem:[#allocation14 + $0x1d8] sm:$0xff]
    %v1135 = vld [vmem:[#allocation14 + $0x1e0] sm:$0xff]
    %v1136 = vld [vmem:[#allocation14 + $0x1e8] sm:$0xff]
    %v1137 = vld [vmem:[#allocation14 + $0x1f0] sm:$0xff]
    %v1138 = vld [vmem:[#allocation14 + $0x1f8] sm:$0xff]
    %v1139 = vld [vmem:[#allocation16] sm:$0x3]
    %v1141 = vlaneseq
    %v1142 = vshrl.u32 %v1141, 7
    %v1143 = vsub.s32 0, %v1142
    %v1144 = vrot.slane %v1139, %v1143
    %v1145 = vlaneseq
    %v1146 = vshrl.u32 %v1145, 7
    %v1147 = vsub.s32 1, %v1146
    %v1148 = vrot.slane %v1139, %v1147
    %1151 = vmatprep.subr.mxu0 %v1076
    %1152 = vmatpush1.msra.mxu0 %v1075
    %1153 = vmatprep.subr.mxu0 %v1078
    %1154 = vmatpush1.msra.mxu0 %v1077
    %1155 = vmatprep.subr.mxu0 %v1080
    %1156 = vmatpush1.msra.mxu0 %v1079
    %1157 = vmatprep.subr.mxu0 %v1082
    %1158 = vmatpush1.msra.mxu0 %v1081
    %1159 = vmatprep.subr.mxu0 %v1084
    %1160 = vmatpush1.msra.mxu0 %v1083
    %1161 = vmatprep.subr.mxu0 %v1086
    %1162 = vmatpush1.msra.mxu0 %v1085
    %1163 = vmatprep.subr.mxu0 %v1088
    %1164 = vmatpush1.msra.mxu0 %v1087
    %1165 = vmatprep.subr.mxu0 %v1090
    %1166 = vmatpush1.msra.mxu0 %v1089
    %1167 = vmatprep.subr.mxu0 %v1092
    %1168 = vmatpush1.msra.mxu0 %v1091
    %1169 = vmatprep.subr.mxu0 %v1094
    %1170 = vmatpush1.msra.mxu0 %v1093
    %1171 = vmatprep.subr.mxu0 %v1096
    %1172 = vmatpush1.msra.mxu0 %v1095
    %1173 = vmatprep.subr.mxu0 %v1098
    %1174 = vmatpush1.msra.mxu0 %v1097
    %1175 = vmatprep.subr.mxu0 %v1100
    %1176 = vmatpush1.msra.mxu0 %v1099
    %1177 = vmatprep.subr.mxu0 %v1102
    %1178 = vmatpush1.msra.mxu0 %v1101
    %1179 = vmatprep.subr.mxu0 %v1104
    %1180 = vmatpush1.msra.mxu0 %v1103
    %1181 = vmatprep.subr.mxu0 %v1106
    %1182 = vmatpush1.msra.mxu0 %v1105
    %1183 = vmatprep.subr.mxu0 %v1108
    %1184 = vmatpush1.msra.mxu0 %v1107
    %1185 = vmatprep.subr.mxu0 %v1110
    %1186 = vmatpush1.msra.mxu0 %v1109
    %1187 = vmatprep.subr.mxu0 %v1112
    %1188 = vmatpush1.msra.mxu0 %v1111
    %1189 = vmatprep.subr.mxu0 %v1114
    %1190 = vmatpush1.msra.mxu0 %v1113
    %1191 = vmatprep.subr.mxu0 %v1116
    %1192 = vmatpush1.msra.mxu0 %v1115
    %1193 = vmatprep.subr.mxu0 %v1118
    %1194 = vmatpush1.msra.mxu0 %v1117
    %1195 = vmatprep.subr.mxu0 %v1120
    %1196 = vmatpush1.msra.mxu0 %v1119
    %1197 = vmatprep.subr.mxu0 %v1122
    %1198 = vmatpush1.msra.mxu0 %v1121
    %1199 = vmatprep.subr.mxu0 %v1124
    %1200 = vmatpush1.msra.mxu0 %v1123
    %1201 = vmatprep.subr.mxu0 %v1126
    %1202 = vmatpush1.msra.mxu0 %v1125
    %1203 = vmatprep.subr.mxu0 %v1128
    %1204 = vmatpush1.msra.mxu0 %v1127
    %1205 = vmatprep.subr.mxu0 %v1130
    %1206 = vmatpush1.msra.mxu0 %v1129
    %1207 = vmatprep.subr.mxu0 %v1132
    %1208 = vmatpush1.msra.mxu0 %v1131
    %1209 = vmatprep.subr.mxu0 %v1134
    %1210 = vmatpush1.msra.mxu0 %v1133
    %1211 = vmatprep.subr.mxu0 %v1136
    %1212 = vmatpush1.msra.mxu0 %v1135
    %1213 = vmatprep.subr.mxu0 %v1138
    %1214 = vmatpush1.msra.mxu0 %v1137
    %1215 = vmatprep.mubr.f32.mxu0 %v1012
    %1216 = vmatmul.mubr.f32.gmra.mrb[0].mxu0 %v1011
    %v1217 = vpop.f32.mrb[0].mxu0
    %v1218 = vadd.f32 %v1144, %v1217
    %v1219 = vpop.f32.mrb[0].mxu0
    %v1220 = vadd.f32 %v1148, %v1219
    %1221 = vmatprep.mubr.f32.mxu0 %v1014
    %1222 = vmatmul.mubr.f32.gmra.mrb[0].mxu0 %v1013
    %v1223 = vpop.f32.mrb[0].mxu0
    %v1224 = vadd.f32 %v1144, %v1223
    %v1225 = vpop.f32.mrb[0].mxu0
    %v1226 = vadd.f32 %v1148, %v1225
    %1227 = vmatprep.mubr.f32.mxu0 %v1016
    %1228 = vmatmul.mubr.f32.gmra.mrb[0].mxu0 %v1015
    %v1229 = vpop.f32.mrb[0].mxu0
    %v1230 = vadd.f32 %v1144, %v1229
    %v1231 = vpop.f32.mrb[0].mxu0
    %v1232 = vadd.f32 %v1148, %v1231
    %1233 = vmatprep.mubr.f32.mxu0 %v1018
    %1234 = vmatmul.mubr.f32.gmra.mrb[0].mxu0 %v1017
    %v1235 = vpop.f32.mrb[0].mxu0
    %v1236 = vadd.f32 %v1144, %v1235
    %v1237 = vpop.f32.mrb[0].mxu0
    %v1238 = vadd.f32 %v1148, %v1237
    %1239 = vmatprep.mubr.f32.mxu0 %v1020
    %1240 = vmatmul.mubr.f32.gmra.mrb[0].mxu0 %v1019
    %v1241 = vpop.f32.mrb[0].mxu0
    %v1242 = vadd.f32 %v1144, %v1241
    %v1243 = vpop.f32.mrb[0].mxu0
    %v1244 = vadd.f32 %v1148, %v1243
    %1245 = vmatprep.mubr.f32.mxu0 %v1022
    %1246 = vmatmul.mubr.f32.gmra.mrb[0].mxu0 %v1021
    %v1247 = vpop.f32.mrb[0].mxu0
    %v1248 = vadd.f32 %v1144, %v1247
    %v1249 = vpop.f32.mrb[0].mxu0
    %v1250 = vadd.f32 %v1148, %v1249
    %1251 = vmatprep.mubr.f32.mxu0 %v1024
    %1252 = vmatmul.mubr.f32.gmra.mrb[0].mxu0 %v1023
    %v1253 = vpop.f32.mrb[0].mxu0
    %v1254 = vadd.f32 %v1144, %v1253
    %v1255 = vpop.f32.mrb[0].mxu0
    %v1256 = vadd.f32 %v1148, %v1255
    %1257 = vmatprep.mubr.f32.mxu0 %v1026
    %1258 = vmatmul.mubr.f32.gmra.mrb[0].mxu0 %v1025
    %v1259 = vpop.f32.mrb[0].mxu0
    %v1260 = vadd.f32 %v1144, %v1259
    %v1261 = vpop.f32.mrb[0].mxu0
    %v1262 = vadd.f32 %v1148, %v1261
    %1263 = vmatprep.mubr.f32.mxu0 %v1028
    %1264 = vmatmul.mubr.f32.gmra.mrb[0].mxu0 %v1027
    %v1265 = vpop.f32.mrb[0].mxu0
    %v1266 = vadd.f32 %v1144, %v1265
    %v1267 = vpop.f32.mrb[0].mxu0
    %v1268 = vadd.f32 %v1148, %v1267
    %1269 = vmatprep.mubr.f32.mxu0 %v1030
    %1270 = vmatmul.mubr.f32.gmra.mrb[0].mxu0 %v1029
    %v1271 = vpop.f32.mrb[0].mxu0
    %v1272 = vadd.f32 %v1144, %v1271
    %v1273 = vpop.f32.mrb[0].mxu0
    %v1274 = vadd.f32 %v1148, %v1273
    %1275 = vmatprep.mubr.f32.mxu0 %v1032
    %1276 = vmatmul.mubr.f32.gmra.mrb[0].mxu0 %v1031
    %v1277 = vpop.f32.mrb[0].mxu0
    %v1278 = vadd.f32 %v1144, %v1277
    %v1279 = vpop.f32.mrb[0].mxu0
    %v1280 = vadd.f32 %v1148, %v1279
    %1281 = vmatprep.mubr.f32.mxu0 %v1034
    %1282 = vmatmul.mubr.f32.gmra.mrb[0].mxu0 %v1033
    %v1283 = vpop.f32.mrb[0].mxu0
    %v1284 = vadd.f32 %v1144, %v1283
    %v1285 = vpop.f32.mrb[0].mxu0
    %v1286 = vadd.f32 %v1148, %v1285
    %1287 = vmatprep.mubr.f32.mxu0 %v1036
    %1288 = vmatmul.mubr.f32.gmra.mrb[0].mxu0 %v1035
    %v1289 = vpop.f32.mrb[0].mxu0
    %v1290 = vadd.f32 %v1144, %v1289
    %v1291 = vpop.f32.mrb[0].mxu0
    %v1292 = vadd.f32 %v1148, %v1291
    %1293 = vmatprep.mubr.f32.mxu0 %v1038
    %1294 = vmatmul.mubr.f32.gmra.mrb[0].mxu0 %v1037
    %v1295 = vpop.f32.mrb[0].mxu0
    %v1296 = vadd.f32 %v1144, %v1295
    %v1297 = vpop.f32.mrb[0].mxu0
    %v1298 = vadd.f32 %v1148, %v1297
    %1299 = vmatprep.mubr.f32.mxu0 %v1040
    %1300 = vmatmul.mubr.f32.gmra.mrb[0].mxu0 %v1039
    %v1301 = vpop.f32.mrb[0].mxu0
    %v1302 = vadd.f32 %v1144, %v1301
    %v1303 = vpop.f32.mrb[0].mxu0
    %v1304 = vadd.f32 %v1148, %v1303
    %1305 = vmatprep.mubr.f32.mxu0 %v1042
    %1306 = vmatmul.mubr.f32.gmra.mrb[0].mxu0 %v1041
    %v1307 = vpop.f32.mrb[0].mxu0
    %v1308 = vadd.f32 %v1144, %v1307
    %v1309 = vpop.f32.mrb[0].mxu0
    %v1310 = vadd.f32 %v1148, %v1309
    %1311 = vmatprep.mubr.f32.mxu0 %v1044
    %1312 = vmatmul.mubr.f32.gmra.mrb[0].mxu0 %v1043
    %v1313 = vpop.f32.mrb[0].mxu0
    %v1314 = vadd.f32 %v1144, %v1313
    %v1315 = vpop.f32.mrb[0].mxu0
    %v1316 = vadd.f32 %v1148, %v1315
    %1317 = vmatprep.mubr.f32.mxu0 %v1046
    %1318 = vmatmul.mubr.f32.gmra.mrb[0].mxu0 %v1045
    %v1319 = vpop.f32.mrb[0].mxu0
    %v1320 = vadd.f32 %v1144, %v1319
    %v1321 = vpop.f32.mrb[0].mxu0
    %v1322 = vadd.f32 %v1148, %v1321
    %1323 = vmatprep.mubr.f32.mxu0 %v1048
    %1324 = vmatmul.mubr.f32.gmra.mrb[0].mxu0 %v1047
    %v1325 = vpop.f32.mrb[0].mxu0
    %v1326 = vadd.f32 %v1144, %v1325
    %v1327 = vpop.f32.mrb[0].mxu0
    %v1328 = vadd.f32 %v1148, %v1327
    %1329 = vmatprep.mubr.f32.mxu0 %v1050
    %1330 = vmatmul.mubr.f32.gmra.mrb[0].mxu0 %v1049
    %v1331 = vpop.f32.mrb[0].mxu0
    %v1332 = vadd.f32 %v1144, %v1331
    %v1333 = vpop.f32.mrb[0].mxu0
    %v1334 = vadd.f32 %v1148, %v1333
    %1335 = vmatprep.mubr.f32.mxu0 %v1052
    %1336 = vmatmul.mubr.f32.gmra.mrb[0].mxu0 %v1051
    %v1337 = vpop.f32.mrb[0].mxu0
    %v1338 = vadd.f32 %v1144, %v1337
    %v1339 = vpop.f32.mrb[0].mxu0
    %v1340 = vadd.f32 %v1148, %v1339
    %1341 = vmatprep.mubr.f32.mxu0 %v1054
    %1342 = vmatmul.mubr.f32.gmra.mrb[0].mxu0 %v1053
    %v1343 = vpop.f32.mrb[0].mxu0
    %v1344 = vadd.f32 %v1144, %v1343
    %v1345 = vpop.f32.mrb[0].mxu0
    %v1346 = vadd.f32 %v1148, %v1345
    %1347 = vmatprep.mubr.f32.mxu0 %v1056
    %1348 = vmatmul.mubr.f32.gmra.mrb[0].mxu0 %v1055
    %v1349 = vpop.f32.mrb[0].mxu0
    %v1350 = vadd.f32 %v1144, %v1349
    %v1351 = vpop.f32.mrb[0].mxu0
    %v1352 = vadd.f32 %v1148, %v1351
    %1353 = vmatprep.mubr.f32.mxu0 %v1058
    %1354 = vmatmul.mubr.f32.gmra.mrb[0].mxu0 %v1057
    %v1355 = vpop.f32.mrb[0].mxu0
    %v1356 = vadd.f32 %v1144, %v1355
    %v1357 = vpop.f32.mrb[0].mxu0
    %v1358 = vadd.f32 %v1148, %v1357
    %1359 = vmatprep.mubr.f32.mxu0 %v1060
    %1360 = vmatmul.mubr.f32.gmra.mrb[0].mxu0 %v1059
    %v1361 = vpop.f32.mrb[0].mxu0
    %v1362 = vadd.f32 %v1144, %v1361
    %v1363 = vpop.f32.mrb[0].mxu0
    %v1364 = vadd.f32 %v1148, %v1363
    %1365 = vmatprep.mubr.f32.mxu0 %v1062
    %1366 = vmatmul.mubr.f32.gmra.mrb[0].mxu0 %v1061
    %v1367 = vpop.f32.mrb[0].mxu0
    %v1368 = vadd.f32 %v1144, %v1367
    %v1369 = vpop.f32.mrb[0].mxu0
    %v1370 = vadd.f32 %v1148, %v1369
    %1371 = vmatprep.mubr.f32.mxu0 %v1064
    %1372 = vmatmul.mubr.f32.gmra.mrb[0].mxu0 %v1063
    %v1373 = vpop.f32.mrb[0].mxu0
    %v1374 = vadd.f32 %v1144, %v1373
    %v1375 = vpop.f32.mrb[0].mxu0
    %v1376 = vadd.f32 %v1148, %v1375
    %1377 = vmatprep.mubr.f32.mxu0 %v1066
    %1378 = vmatmul.mubr.f32.gmra.mrb[0].mxu0 %v1065
    %v1379 = vpop.f32.mrb[0].mxu0
    %v1380 = vadd.f32 %v1144, %v1379
    %v1381 = vpop.f32.mrb[0].mxu0
    %v1382 = vadd.f32 %v1148, %v1381
    %1383 = vmatprep.mubr.f32.mxu0 %v1068
    %1384 = vmatmul.mubr.f32.gmra.mrb[0].mxu0 %v1067
    %v1385 = vpop.f32.mrb[0].mxu0
    %v1386 = vadd.f32 %v1144, %v1385
    %v1387 = vpop.f32.mrb[0].mxu0
    %v1388 = vadd.f32 %v1148, %v1387
    %1389 = vmatprep.mubr.f32.mxu0 %v1070
    %1390 = vmatmul.mubr.f32.gmra.mrb[0].mxu0 %v1069
    %v1391 = vpop.f32.mrb[0].mxu0
    %v1392 = vadd.f32 %v1144, %v1391
    %v1393 = vpop.f32.mrb[0].mxu0
    %v1394 = vadd.f32 %v1148, %v1393
    %1395 = vmatprep.mubr.f32.mxu0 %v1072
    %1396 = vmatmul.mubr.f32.gmra.mrb[0].mxu0 %v1071
    %v1397 = vpop.f32.mrb[0].mxu0
    %v1398 = vadd.f32 %v1144, %v1397
    %v1399 = vpop.f32.mrb[0].mxu0
    %v1400 = vadd.f32 %v1148, %v1399
    %1401 = vmatprep.mubr.f32.mxu0 %v1074
    %1402 = vmatmul.mubr.f32.gmra.mrb[0].mxu0 %v1073
    %v1403 = vpop.f32.mrb[0].mxu0
    %v1404 = vadd.f32 %v1144, %v1403
    %v1405 = vpop.f32.mrb[0].mxu0
    %v1406 = vadd.f32 %v1148, %v1405
    %1407 = vdwg.mxu0
    %1408 = vst [vmem:[#allocation17] sm:$0xff] %v550
    %1409 = vst [vmem:[#allocation17 + $0x8] sm:$0xff] %v551
    %1410 = vst [vmem:[#allocation17 + $0x10] sm:$0xff] %v552
    %1411 = vst [vmem:[#allocation17 + $0x18] sm:$0xff] %v553
    %1412 = vst [vmem:[#allocation17 + $0x20] sm:$0xff] %v554
    %1413 = vst [vmem:[#allocation17 + $0x28] sm:$0xff] %v555
    %1414 = vst [vmem:[#allocation17 + $0x30] sm:$0xff] %v556
    %1415 = vst [vmem:[#allocation17 + $0x38] sm:$0xff] %v557
    %1416 = vst [vmem:[#allocation17 + $0x40] sm:$0xff] %v558
    %1417 = vst [vmem:[#allocation17 + $0x48] sm:$0xff] %v559
    %1418 = vst [vmem:[#allocation17 + $0x50] sm:$0xff] %v560
    %1419 = vst [vmem:[#allocation17 + $0x58] sm:$0xff] %v561
    %1420 = vst [vmem:[#allocation17 + $0x60] sm:$0xff] %v562
    %1421 = vst [vmem:[#allocation17 + $0x68] sm:$0xff] %v563
    %1422 = vst [vmem:[#allocation17 + $0x70] sm:$0xff] %v564
    %1423 = vst [vmem:[#allocation17 + $0x78] sm:$0xff] %v565
    %1424 = vst [vmem:[#allocation17 + $0x80] sm:$0xff] %v566
    %1425 = vst [vmem:[#allocation17 + $0x88] sm:$0xff] %v567
    %1426 = vst [vmem:[#allocation17 + $0x90] sm:$0xff] %v568
    %1427 = vst [vmem:[#allocation17 + $0x98] sm:$0xff] %v569
    %1428 = vst [vmem:[#allocation17 + $0xa0] sm:$0xff] %v570
    %1429 = vst [vmem:[#allocation17 + $0xa8] sm:$0xff] %v571
    %1430 = vst [vmem:[#allocation17 + $0xb0] sm:$0xff] %v572
    %1431 = vst [vmem:[#allocation17 + $0xb8] sm:$0xff] %v573
    %1432 = vst [vmem:[#allocation17 + $0xc0] sm:$0xff] %v574
    %1433 = vst [vmem:[#allocation17 + $0xc8] sm:$0xff] %v575
    %1434 = vst [vmem:[#allocation17 + $0xd0] sm:$0xff] %v576
    %1435 = vst [vmem:[#allocation17 + $0xd8] sm:$0xff] %v577
    %1436 = vst [vmem:[#allocation17 + $0xe0] sm:$0xff] %v578
    %1437 = vst [vmem:[#allocation17 + $0xe8] sm:$0xff] %v579
    %1438 = vst [vmem:[#allocation17 + $0xf0] sm:$0xff] %v580
    %1439 = vst [vmem:[#allocation17 + $0xf8] sm:$0xff] %v581
    %1440 = vst [vmem:[#allocation17 + $0x100] sm:$0xff] %v582
    %1441 = vst [vmem:[#allocation17 + $0x108] sm:$0xff] %v583
    %1442 = vst [vmem:[#allocation17 + $0x110] sm:$0xff] %v584
    %1443 = vst [vmem:[#allocation17 + $0x118] sm:$0xff] %v585
    %1444 = vst [vmem:[#allocation17 + $0x120] sm:$0xff] %v586
    %1445 = vst [vmem:[#allocation17 + $0x128] sm:$0xff] %v587
    %1446 = vst [vmem:[#allocation17 + $0x130] sm:$0xff] %v588
    %1447 = vst [vmem:[#allocation17 + $0x138] sm:$0xff] %v589
    %1448 = vst [vmem:[#allocation17 + $0x140] sm:$0xff] %v590
    %1449 = vst [vmem:[#allocation17 + $0x148] sm:$0xff] %v591
    %1450 = vst [vmem:[#allocation17 + $0x150] sm:$0xff] %v592
    %1451 = vst [vmem:[#allocation17 + $0x158] sm:$0xff] %v593
    %1452 = vst [vmem:[#allocation17 + $0x160] sm:$0xff] %v594
    %1453 = vst [vmem:[#allocation17 + $0x168] sm:$0xff] %v595
    %1454 = vst [vmem:[#allocation17 + $0x170] sm:$0xff] %v596
    %1455 = vst [vmem:[#allocation17 + $0x178] sm:$0xff] %v597
    %1456 = vst [vmem:[#allocation17 + $0x180] sm:$0xff] %v598
    %1457 = vst [vmem:[#allocation17 + $0x188] sm:$0xff] %v599
    %1458 = vst [vmem:[#allocation17 + $0x190] sm:$0xff] %v600
    %1459 = vst [vmem:[#allocation17 + $0x198] sm:$0xff] %v601
    %1460 = vst [vmem:[#allocation17 + $0x1a0] sm:$0xff] %v602
    %1461 = vst [vmem:[#allocation17 + $0x1a8] sm:$0xff] %v603
    %1462 = vst [vmem:[#allocation17 + $0x1b0] sm:$0xff] %v604
    %1463 = vst [vmem:[#allocation17 + $0x1b8] sm:$0xff] %v605
    %1464 = vst [vmem:[#allocation17 + $0x1c0] sm:$0xff] %v606
    %1465 = vst [vmem:[#allocation17 + $0x1c8] sm:$0xff] %v607
    %1466 = vst [vmem:[#allocation17 + $0x1d0] sm:$0xff] %v608
    %1467 = vst [vmem:[#allocation17 + $0x1d8] sm:$0xff] %v609
    %1468 = vst [vmem:[#allocation17 + $0x1e0] sm:$0xff] %v610
    %1469 = vst [vmem:[#allocation17 + $0x1e8] sm:$0xff] %v611
    %1470 = vst [vmem:[#allocation17 + $0x1f0] sm:$0xff] %v612
    %1471 = vst [vmem:[#allocation17 + $0x1f8] sm:$0xff] %v613
    %1472 = vst [vmem:[#allocation18] sm:$0xff] %v821
    %1473 = vst [vmem:[#allocation18 + $0x8] sm:$0xff] %v823
    %1474 = vst [vmem:[#allocation18 + $0x10] sm:$0xff] %v827
    %1475 = vst [vmem:[#allocation18 + $0x18] sm:$0xff] %v829
    %1476 = vst [vmem:[#allocation18 + $0x20] sm:$0xff] %v833
    %1477 = vst [vmem:[#allocation18 + $0x28] sm:$0xff] %v835
    %1478 = vst [vmem:[#allocation18 + $0x30] sm:$0xff] %v839
    %1479 = vst [vmem:[#allocation18 + $0x38] sm:$0xff] %v841
    %1480 = vst [vmem:[#allocation18 + $0x40] sm:$0xff] %v845
    %1481 = vst [vmem:[#allocation18 + $0x48] sm:$0xff] %v847
    %1482 = vst [vmem:[#allocation18 + $0x50] sm:$0xff] %v851
    %1483 = vst [vmem:[#allocation18 + $0x58] sm:$0xff] %v853
    %1484 = vst [vmem:[#allocation18 + $0x60] sm:$0xff] %v857
    %1485 = vst [vmem:[#allocation18 + $0x68] sm:$0xff] %v859
    %1486 = vst [vmem:[#allocation18 + $0x70] sm:$0xff] %v863
    %1487 = vst [vmem:[#allocation18 + $0x78] sm:$0xff] %v865
    %1488 = vst [vmem:[#allocation18 + $0x80] sm:$0xff] %v869
    %1489 = vst [vmem:[#allocation18 + $0x88] sm:$0xff] %v871
    %1490 = vst [vmem:[#allocation18 + $0x90] sm:$0xff] %v875
    %1491 = vst [vmem:[#allocation18 + $0x98] sm:$0xff] %v877
    %1492 = vst [vmem:[#allocation18 + $0xa0] sm:$0xff] %v881
    %1493 = vst [vmem:[#allocation18 + $0xa8] sm:$0xff] %v883
    %1494 = vst [vmem:[#allocation18 + $0xb0] sm:$0xff] %v887
    %1495 = vst [vmem:[#allocation18 + $0xb8] sm:$0xff] %v889
    %1496 = vst [vmem:[#allocation18 + $0xc0] sm:$0xff] %v893
    %1497 = vst [vmem:[#allocation18 + $0xc8] sm:$0xff] %v895
    %1498 = vst [vmem:[#allocation18 + $0xd0] sm:$0xff] %v899
    %1499 = vst [vmem:[#allocation18 + $0xd8] sm:$0xff] %v901
    %1500 = vst [vmem:[#allocation18 + $0xe0] sm:$0xff] %v905
    %1501 = vst [vmem:[#allocation18 + $0xe8] sm:$0xff] %v907
    %1502 = vst [vmem:[#allocation18 + $0xf0] sm:$0xff] %v911
    %1503 = vst [vmem:[#allocation18 + $0xf8] sm:$0xff] %v913
    %1504 = vst [vmem:[#allocation18 + $0x100] sm:$0xff] %v917
    %1505 = vst [vmem:[#allocation18 + $0x108] sm:$0xff] %v919
    %1506 = vst [vmem:[#allocation18 + $0x110] sm:$0xff] %v923
    %1507 = vst [vmem:[#allocation18 + $0x118] sm:$0xff] %v925
    %1508 = vst [vmem:[#allocation18 + $0x120] sm:$0xff] %v929
    %1509 = vst [vmem:[#allocation18 + $0x128] sm:$0xff] %v931
    %1510 = vst [vmem:[#allocation18 + $0x130] sm:$0xff] %v935
    %1511 = vst [vmem:[#allocation18 + $0x138] sm:$0xff] %v937
    %1512 = vst [vmem:[#allocation18 + $0x140] sm:$0xff] %v941
    %1513 = vst [vmem:[#allocation18 + $0x148] sm:$0xff] %v943
    %1514 = vst [vmem:[#allocation18 + $0x150] sm:$0xff] %v947
    %1515 = vst [vmem:[#allocation18 + $0x158] sm:$0xff] %v949
    %1516 = vst [vmem:[#allocation18 + $0x160] sm:$0xff] %v953
    %1517 = vst [vmem:[#allocation18 + $0x168] sm:$0xff] %v955
    %1518 = vst [vmem:[#allocation18 + $0x170] sm:$0xff] %v959
    %1519 = vst [vmem:[#allocation18 + $0x178] sm:$0xff] %v961
    %1520 = vst [vmem:[#allocation18 + $0x180] sm:$0xff] %v965
    %1521 = vst [vmem:[#allocation18 + $0x188] sm:$0xff] %v967
    %1522 = vst [vmem:[#allocation18 + $0x190] sm:$0xff] %v971
    %1523 = vst [vmem:[#allocation18 + $0x198] sm:$0xff] %v973
    %1524 = vst [vmem:[#allocation18 + $0x1a0] sm:$0xff] %v977
    %1525 = vst [vmem:[#allocation18 + $0x1a8] sm:$0xff] %v979
    %1526 = vst [vmem:[#allocation18 + $0x1b0] sm:$0xff] %v983
    %1527 = vst [vmem:[#allocation18 + $0x1b8] sm:$0xff] %v985
    %1528 = vst [vmem:[#allocation18 + $0x1c0] sm:$0xff] %v989
    %1529 = vst [vmem:[#allocation18 + $0x1c8] sm:$0xff] %v991
    %1530 = vst [vmem:[#allocation18 + $0x1d0] sm:$0xff] %v995
    %1531 = vst [vmem:[#allocation18 + $0x1d8] sm:$0xff] %v997
    %1532 = vst [vmem:[#allocation18 + $0x1e0] sm:$0xff] %v1001
    %1533 = vst [vmem:[#allocation18 + $0x1e8] sm:$0xff] %v1003
    %1534 = vst [vmem:[#allocation18 + $0x1f0] sm:$0xff] %v1007
    %1535 = vst [vmem:[#allocation18 + $0x1f8] sm:$0xff] %v1009
    %1536 = vst [vmem:[#allocation20] sm:$0xff] %v1218
    %1537 = vst [vmem:[#allocation20 + $0x8] sm:$0xff] %v1220
    %1538 = vst [vmem:[#allocation20 + $0x10] sm:$0xff] %v1224
    %1539 = vst [vmem:[#allocation20 + $0x18] sm:$0xff] %v1226
    %1540 = vst [vmem:[#allocation20 + $0x20] sm:$0xff] %v1230
    %1541 = vst [vmem:[#allocation20 + $0x28] sm:$0xff] %v1232
    %1542 = vst [vmem:[#allocation20 + $0x30] sm:$0xff] %v1236
    %1543 = vst [vmem:[#allocation20 + $0x38] sm:$0xff] %v1238
    %1544 = vst [vmem:[#allocation20 + $0x40] sm:$0xff] %v1242
    %1545 = vst [vmem:[#allocation20 + $0x48] sm:$0xff] %v1244
    %1546 = vst [vmem:[#allocation20 + $0x50] sm:$0xff] %v1248
    %1547 = vst [vmem:[#allocation20 + $0x58] sm:$0xff] %v1250
    %1548 = vst [vmem:[#allocation20 + $0x60] sm:$0xff] %v1254
    %1549 = vst [vmem:[#allocation20 + $0x68] sm:$0xff] %v1256
    %1550 = vst [vmem:[#allocation20 + $0x70] sm:$0xff] %v1260
    %1551 = vst [vmem:[#allocation20 + $0x78] sm:$0xff] %v1262
    %1552 = vst [vmem:[#allocation20 + $0x80] sm:$0xff] %v1266
    %1553 = vst [vmem:[#allocation20 + $0x88] sm:$0xff] %v1268
    %1554 = vst [vmem:[#allocation20 + $0x90] sm:$0xff] %v1272
    %1555 = vst [vmem:[#allocation20 + $0x98] sm:$0xff] %v1274
    %1556 = vst [vmem:[#allocation20 + $0xa0] sm:$0xff] %v1278
    %1557 = vst [vmem:[#allocation20 + $0xa8] sm:$0xff] %v1280
    %1558 = vst [vmem:[#allocation20 + $0xb0] sm:$0xff] %v1284
    %1559 = vst [vmem:[#allocation20 + $0xb8] sm:$0xff] %v1286
    %1560 = vst [vmem:[#allocation20 + $0xc0] sm:$0xff] %v1290
    %1561 = vst [vmem:[#allocation20 + $0xc8] sm:$0xff] %v1292
    %1562 = vst [vmem:[#allocation20 + $0xd0] sm:$0xff] %v1296
    %1563 = vst [vmem:[#allocation20 + $0xd8] sm:$0xff] %v1298
    %1564 = vst [vmem:[#allocation20 + $0xe0] sm:$0xff] %v1302
    %1565 = vst [vmem:[#allocation20 + $0xe8] sm:$0xff] %v1304
    %1566 = vst [vmem:[#allocation20 + $0xf0] sm:$0xff] %v1308
    %1567 = vst [vmem:[#allocation20 + $0xf8] sm:$0xff] %v1310
    %1568 = vst [vmem:[#allocation20 + $0x100] sm:$0xff] %v1314
    %1569 = vst [vmem:[#allocation20 + $0x108] sm:$0xff] %v1316
    %1570 = vst [vmem:[#allocation20 + $0x110] sm:$0xff] %v1320
    %1571 = vst [vmem:[#allocation20 + $0x118] sm:$0xff] %v1322
    %1572 = vst [vmem:[#allocation20 + $0x120] sm:$0xff] %v1326
    %1573 = vst [vmem:[#allocation20 + $0x128] sm:$0xff] %v1328
    %1574 = vst [vmem:[#allocation20 + $0x130] sm:$0xff] %v1332
    %1575 = vst [vmem:[#allocation20 + $0x138] sm:$0xff] %v1334
    %1576 = vst [vmem:[#allocation20 + $0x140] sm:$0xff] %v1338
    %1577 = vst [vmem:[#allocation20 + $0x148] sm:$0xff] %v1340
    %1578 = vst [vmem:[#allocation20 + $0x150] sm:$0xff] %v1344
    %1579 = vst [vmem:[#allocation20 + $0x158] sm:$0xff] %v1346
    %1580 = vst [vmem:[#allocation20 + $0x160] sm:$0xff] %v1350
    %1581 = vst [vmem:[#allocation20 + $0x168] sm:$0xff] %v1352
    %1582 = vst [vmem:[#allocation20 + $0x170] sm:$0xff] %v1356
    %1583 = vst [vmem:[#allocation20 + $0x178] sm:$0xff] %v1358
    %1584 = vst [vmem:[#allocation20 + $0x180] sm:$0xff] %v1362
    %1585 = vst [vmem:[#allocation20 + $0x188] sm:$0xff] %v1364
    %1586 = vst [vmem:[#allocation20 + $0x190] sm:$0xff] %v1368
    %1587 = vst [vmem:[#allocation20 + $0x198] sm:$0xff] %v1370
    %1588 = vst [vmem:[#allocation20 + $0x1a0] sm:$0xff] %v1374
    %1589 = vst [vmem:[#allocation20 + $0x1a8] sm:$0xff] %v1376
    %1590 = vst [vmem:[#allocation20 + $0x1b0] sm:$0xff] %v1380
    %1591 = vst [vmem:[#allocation20 + $0x1b8] sm:$0xff] %v1382
    %1592 = vst [vmem:[#allocation20 + $0x1c0] sm:$0xff] %v1386
    %1593 = vst [vmem:[#allocation20 + $0x1c8] sm:$0xff] %v1388
    %1594 = vst [vmem:[#allocation20 + $0x1d0] sm:$0xff] %v1392
    %1595 = vst [vmem:[#allocation20 + $0x1d8] sm:$0xff] %v1394
    %1596 = vst [vmem:[#allocation20 + $0x1e0] sm:$0xff] %v1398
    %1597 = vst [vmem:[#allocation20 + $0x1e8] sm:$0xff] %v1400
    %1598 = vst [vmem:[#allocation20 + $0x1f0] sm:$0xff] %v1404
    %1599 = vst [vmem:[#allocation20 + $0x1f8] sm:$0xff] %v1406
    // Predicated region
    $region74: #{tpu_custom_call.1} parent=1 // pred_check
      _
    $region75: #{tpu_custom_call.1} parent=1 // pred_check_branch
      %1601 = sbr.rel (0) target = $region77
    $region76: #{tpu_custom_call.1} parent=1 // pred_region
      %s1603 = ssub.s32 8192, 8192
      %1604 = vsyncadd [#allocation4], %s1603
      %s1605 = sshll.u32 [#allocation17], 4
      %s1606 = int_to_ptr.vmem [resolvable:$true] %s1605
      %1611 = dma.vmem_to_hbm [thread:$0]  %s1606, 8192, %s9, [#allocation4], 256, 256, 16
    $region77: #{tpu_custom_call.1} parent=1 // pred_fallthru
      _
    // Predicated region
    $region78: #{tpu_custom_call.1} parent=1 // pred_check
      _
    $region79: #{tpu_custom_call.1} parent=1 // pred_check_branch
      %1613 = sbr.rel (0) target = $region81
    $region80: #{tpu_custom_call.1} parent=1 // pred_region
      %s1615 = ssub.s32 8192, 8192
      %1616 = vsyncadd [#allocation19], %s1615
      %s1617 = sshll.u32 [#allocation18], 4
      %s1618 = int_to_ptr.vmem [resolvable:$true] %s1617
      %1623 = dma.vmem_to_hbm [thread:$0]  %s1618, 8192, %s10, [#allocation19], 256, 256, 16
    $region81: #{tpu_custom_call.1} parent=1 // pred_fallthru
      _
    // Predicated region
    $region82: #{tpu_custom_call.1} parent=1 // pred_check
      _
    $region83: #{tpu_custom_call.1} parent=1 // pred_check_branch
      %1625 = sbr.rel (0) target = $region85
    $region84: #{tpu_custom_call.1} parent=1 // pred_region
      %s1627 = ssub.s32 8192, 8192
      %1628 = vsyncadd [#allocation19], %s1627
      %s1629 = sshll.u32 [#allocation20], 4
      %s1630 = int_to_ptr.vmem [resolvable:$true] %s1629
      %1635 = dma.vmem_to_hbm [thread:$0]  %s1630, 8192, %s11, [#allocation19], 256, 256, 16
    $region85: #{tpu_custom_call.1} parent=1 // pred_fallthru
      _
    // Predicated region
    $region86: #{tpu_custom_call.1} parent=1 // pred_check
      _
    $region87: #{tpu_custom_call.1} parent=1 // pred_check_branch
      %1637 = sbr.rel (0) target = $region89
    $region88: #{tpu_custom_call.1} parent=1 // pred_region
      %1638 = dma.done [#allocation4], 8192
    $region89: #{tpu_custom_call.1} parent=1 // pred_fallthru
      _
    // Predicated region
    $region90: #{tpu_custom_call.1} parent=1 // pred_check
      _
    $region91: #{tpu_custom_call.1} parent=1 // pred_check_branch
      %1640 = sbr.rel (0) target = $region93
    $region92: #{tpu_custom_call.1} parent=1 // pred_region
      %1641 = dma.done [#allocation19], 8192
    $region93: #{tpu_custom_call.1} parent=1 // pred_fallthru
      _
    // Predicated region
    $region94: #{tpu_custom_call.1} parent=1 // pred_check
      _
    $region95: #{tpu_custom_call.1} parent=1 // pred_check_branch
      %1643 = sbr.rel (0) target = $region97
    $region96: #{tpu_custom_call.1} parent=1 // pred_region
      %1644 = dma.done [#allocation19], 8192
    $region97: #{tpu_custom_call.1} parent=1 // pred_fallthru
      _
    %1645 = vsyncpa [#allocation3], 1
    %1646 = vsyncpa [#allocation6], 1
    %1647 = vsyncpa [#allocation9], 1
    %1648 = vsyncpa [#allocation12], 1
    %1649 = vsyncpa [#allocation15], 1
    %1650 = vsyncpa [#allocation4], 1
    %1651 = vsyncpa [#allocation19], 1

</llo_original>
